<compile_context>
chip_gen: v7x
topology: tpu7x:2x2x1
jax: 0.10.0
libtpu: 0.0.40
codegen_flags: <defaults>
</compile_context>

<pallas_src>
import math

import jax
import jax.numpy as jnp
from jax import lax
from jax.experimental import pallas as pl
from jax.experimental.pallas import tpu as pltpu


def _vpr_kernel(patches_ref, wconv_ref, bconv_ref, wa_ref, ba_ref, cent_ref,
                out_ref):
    eps = 1e-12
    TB, N, P = patches_ref.shape
    D = wconv_ref.shape[1]
    K = wa_ref.shape[1]
    R = TB * N

    # ---- feature extractor: conv (im2col matmul) + bias + ReLU -------------
    patches = patches_ref[...].reshape(R, P)                     # bf16 [R, P]
    feats = jnp.dot(patches, wconv_ref[...],
                    preferred_element_type=jnp.float32)          # f32 [R, D]
    feats = jnp.maximum(feats + bconv_ref[...], 0.0)             # bias + ReLU
    feats_bf = feats.astype(jnp.bfloat16)

    # ---- NetVLAD soft assignment (1x1 conv -> softmax) ----------------------
    logits = jnp.dot(feats_bf, wa_ref[...],
                     preferred_element_type=jnp.float32)         # [R, K]
    logits = logits + ba_ref[...]
    m = jnp.max(logits, axis=-1, keepdims=True)
    e = jnp.exp(logits - m)
    assign = e * pl.reciprocal(jnp.sum(e, axis=-1, keepdims=True), approx=True)
    assign_bf = assign.astype(jnp.bfloat16)                      # [R, K]

    # Ones column folded into feats: one matmul produces both A^T F and
    # sum_n a[n,k] (no separate cross-sublane reduce).
    ones_col = jnp.ones((R, 1), jnp.bfloat16)
    feats_aug = jnp.concatenate([feats_bf, ones_col], axis=-1)   # [R, D+1]

    cent = cent_ref[...]                                         # f32 [K, D]

    # ---- per-image VLAD aggregation + normalizations (TB small, static) -----
    for b in range(TB):
        a_b = assign_bf[b * N:(b + 1) * N]                       # [N, K]
        f_b = feats_aug[b * N:(b + 1) * N]                       # [N, D+1]
        # Contract over N directly on the MXU (no explicit transpose).
        agg = lax.dot_general(a_b, f_b,
                              dimension_numbers=(((0,), (0,)), ((), ())),
                              preferred_element_type=jnp.float32)  # [K, D+1]
        at_f = agg[:, :D]                                        # [K, D]
        a_sum = agg[:, D:D + 1]                                  # [K, 1]
        vlad = at_f - a_sum * cent                               # residual sum

        # intra-normalization (per cluster), then global L2 normalization
        intra = lax.rsqrt(jnp.sum(vlad * vlad, axis=-1, keepdims=True) + eps)
        vlad = vlad * intra
        gnorm = lax.rsqrt(jnp.sum(vlad * vlad) + eps)
        out_ref[b] = vlad * gnorm                                # [K, D] f32


def vpr_forward(x, params, *, tb=None):
    """x: NCHW float32 [B, C, H, W]  ->  [B, K*D] VLAD descriptors."""
    wconv, bconv, wa, ba, cent = params
    B, C, H, W = x.shape
    kh = kw = 3
    P = C * kh * kw
    N = H * W
    D = wconv.shape[1]
    K = cent.shape[0]

    # Batch tile: amortize per-grid-step overhead (must divide B).
    if tb is None:
        tb = math.gcd(B, 8)
    assert B % tb == 0

    # Pad the contraction dim to an MXU/sublane friendly size.
    P_pad = max(64, ((P + 63) // 64) * 64)

    # im2col (glue, plain JAX): [B, C*kh*kw, H, W] -> [B, N, P]
    # TODO(synk): for production image resolutions, move im2col in-kernel
    # (9 shifted taps / accumulated small matmuls) and tile the N axis with a
    # (K, D+1) accumulator + pl.when phases so the per-image slab fits v7x VMEM.
    patches = lax.conv_general_dilated_patches(
        x, filter_shape=(kh, kw), window_strides=(1, 1), padding="SAME",
        dimension_numbers=("NCHW", "OIHW", "NCHW"))
    patches = patches.reshape(B, P, N).transpose(0, 2, 1)        # [B, N, P]
    patches = jnp.pad(patches, ((0, 0), (0, 0), (0, P_pad - P)))
    patches = patches.astype(jnp.bfloat16)

    wconv_p = jnp.pad(wconv, ((0, P_pad - P), (0, 0))).astype(jnp.bfloat16)
    wa_b = wa.astype(jnp.bfloat16)
    bconv_f = bconv.reshape(1, D).astype(jnp.float32)
    ba_f = ba.reshape(1, K).astype(jnp.float32)
    cent_f = cent.astype(jnp.float32)

    out = pl.pallas_call(
        _vpr_kernel,
        out_shape=jax.ShapeDtypeStruct((B, K, D), jnp.float32),
        grid_spec=pl.GridSpec(
            grid=(B // tb,),
            in_specs=[
                pl.BlockSpec((tb, N, P_pad), lambda b: (b, 0, 0)),  # patches
                pl.BlockSpec((P_pad, D),     lambda b: (0, 0)),     # conv weight
                pl.BlockSpec((1, D),         lambda b: (0, 0)),     # conv bias
                pl.BlockSpec((D, K),         lambda b: (0, 0)),     # assign weight
                pl.BlockSpec((1, K),         lambda b: (0, 0)),     # assign bias
                pl.BlockSpec((K, D),         lambda b: (0, 0)),     # centroids
            ],
            out_specs=pl.BlockSpec((tb, K, D), lambda b: (b, 0, 0)),
        ),
        compiler_params=pltpu.CompilerParams(
            dimension_semantics=("parallel",)),
    )(patches, wconv_p, bconv_f, wa_b, ba_f, cent_f)

    # lane-dense [B, K, D] kernel output; flatten in the wrapper (metadata-only)
    return out.reshape(B, K * D)


def init_params(key, C=4, D=128, K=8, kh=3, kw=3):
    P = C * kh * kw
    k1, k2, k3, k4, k5 = jax.random.split(key, 5)
    wconv = jax.random.normal(k1, (P, D), jnp.float32) * 0.1
    bconv = jax.random.normal(k2, (1, D), jnp.float32) * 0.01
    wa = jax.random.normal(k3, (D, K), jnp.float32) * 0.1
    ba = jax.random.normal(k4, (1, K), jnp.float32) * 0.01
    cent = jax.random.normal(k5, (K, D), jnp.float32) * 0.1
    return wconv, bconv, wa, ba, cent


if __name__ == "__main__":
    key = jax.random.PRNGKey(0)
    kx, kp = jax.random.split(key)

    B, C, H, W = 2, 4, 16, 16          # NCHW, matching PyTorch convention
    x = jax.random.normal(kx, (B, C, H, W), jnp.float32)
    params = init_params(kp, C=C, D=128, K=8)

    out = vpr_forward(x, params)
    out = jax.block_until_ready(out)
    assert out.shape == (B, 8 * 128)
    assert bool(jnp.all(jnp.isfinite(out)))
    print("KERNEL_OK")
</pallas_src>

<mosaic_0001>
module attributes {stable_mosaic.version = 11 : i64} {
  func.func @_vpr_kernel(%arg0: i32, %arg1: memref<2x256x64xbf16, #tpu.memory_space<vmem>>, %arg2: memref<64x128xbf16, #tpu.memory_space<vmem>>, %arg3: memref<1x128xf32, #tpu.memory_space<vmem>>, %arg4: memref<128x8xbf16, #tpu.memory_space<vmem>>, %arg5: memref<1x8xf32, #tpu.memory_space<vmem>>, %arg6: memref<8x128xf32, #tpu.memory_space<vmem>>, %arg7: memref<2x8x128xf32, #tpu.memory_space<vmem>>) attributes {dimension_semantics = [#tpu.dimension_semantics<parallel>], iteration_bounds = array<i64: 1>, scalar_prefetch = 0 : i64, scratch_operands = 0 : i64, tpu.core_type = #tpu.core_type<tc>, window_params = [{transform_indices = @transform_0, window_bounds = array<i64: 2, 256, 64>}, {pipeline_mode = #tpu.pipeline_mode<synchronous>, transform_indices = @transform_1, window_bounds = array<i64: 64, 128>}, {pipeline_mode = #tpu.pipeline_mode<synchronous>, transform_indices = @transform_2, window_bounds = array<i64: 1, 128>}, {pipeline_mode = #tpu.pipeline_mode<synchronous>, transform_indices = @transform_3, window_bounds = array<i64: 128, 8>}, {pipeline_mode = #tpu.pipeline_mode<synchronous>, transform_indices = @transform_4, window_bounds = array<i64: 1, 8>}, {pipeline_mode = #tpu.pipeline_mode<synchronous>, transform_indices = @transform_5, window_bounds = array<i64: 8, 128>}, {transform_indices = @transform_6, window_bounds = array<i64: 2, 8, 128>}]} {
    %c0 = arith.constant 0 : index
    %c0_0 = arith.constant 0 : index
    %c0_1 = arith.constant 0 : index
    %0 = vector.load %arg1[%c0, %c0_0, %c0_1] : memref<2x256x64xbf16, #tpu.memory_space<vmem>>, vector<2x256x64xbf16>
    %1 = vector.shape_cast %0 : vector<2x256x64xbf16> to vector<512x64xbf16>
    %c0_2 = arith.constant 0 : index
    %c0_3 = arith.constant 0 : index
    %2 = vector.load %arg2[%c0_2, %c0_3] : memref<64x128xbf16, #tpu.memory_space<vmem>>, vector<64x128xbf16>
    %cst = arith.constant dense<0.000000e+00> : vector<512x128xf32>
    %3 = tpu.matmul %1, %2, %cst {dimension_numbers = #tpu.dot_dimension_numbers<[1], [0], [0], [1], [0, 0, 1, 1], [], []>} : vector<512x64xbf16>, vector<64x128xbf16>, vector<512x128xf32> -> vector<512x128xf32>
    %c0_4 = arith.constant 0 : index
    %c0_5 = arith.constant 0 : index
    %4 = vector.load %arg3[%c0_4, %c0_5] : memref<1x128xf32, #tpu.memory_space<vmem>>, vector<1x128xf32>
    %5 = vector.broadcast %4 : vector<1x128xf32> to vector<512x128xf32>
    %6 = arith.addf %3, %5 : vector<512x128xf32>
    %cst_6 = arith.constant 0.000000e+00 : f32
    %7 = vector.broadcast %cst_6 : f32 to vector<512x128xf32>
    %8 = arith.maximumf %6, %7 : vector<512x128xf32>
    %9 = arith.truncf %8 : vector<512x128xf32> to vector<512x128xbf16>
    %c0_7 = arith.constant 0 : index
    %c0_8 = arith.constant 0 : index
    %10 = vector.load %arg4[%c0_7, %c0_8] : memref<128x8xbf16, #tpu.memory_space<vmem>>, vector<128x8xbf16>
    %cst_9 = arith.constant dense<0.000000e+00> : vector<512x8xf32>
    %11 = tpu.matmul %9, %10, %cst_9 {dimension_numbers = #tpu.dot_dimension_numbers<[1], [0], [0], [1], [0, 0, 1, 1], [], []>} : vector<512x128xbf16>, vector<128x8xbf16>, vector<512x8xf32> -> vector<512x8xf32>
    %c0_10 = arith.constant 0 : index
    %c0_11 = arith.constant 0 : index
    %12 = vector.load %arg5[%c0_10, %c0_11] : memref<1x8xf32, #tpu.memory_space<vmem>>, vector<1x8xf32>
    %13 = vector.broadcast %12 : vector<1x8xf32> to vector<512x8xf32>
    %14 = arith.addf %11, %13 : vector<512x8xf32>
    %cst_12 = arith.constant dense<0xFF800000> : vector<512xf32>
    %15 = vector.multi_reduction <maximumf>, %14, %cst_12 [1] : vector<512x8xf32> to vector<512xf32>
    %16 = vector.shape_cast %15 : vector<512xf32> to vector<512x1xf32>
    %17 = vector.broadcast %16 : vector<512x1xf32> to vector<512x8xf32>
    %18 = arith.subf %14, %17 : vector<512x8xf32>
    %19 = math.exp %18 : vector<512x8xf32>
    %cst_13 = arith.constant dense<0.000000e+00> : vector<512xf32>
    %20 = vector.multi_reduction <add>, %19, %cst_13 [1] : vector<512x8xf32> to vector<512xf32>
    %21 = vector.shape_cast %20 : vector<512xf32> to vector<512x1xf32>
    %22 = tpu.reciprocal %21 {approx = true} : vector<512x1xf32> -> vector<512x1xf32>
    %23 = vector.broadcast %22 : vector<512x1xf32> to vector<512x8xf32>
    %24 = arith.mulf %19, %23 : vector<512x8xf32>
    %25 = arith.truncf %24 : vector<512x8xf32> to vector<512x8xbf16>
    %cst_14 = arith.constant 1.000000e+00 : bf16
    %26 = vector.broadcast %cst_14 : bf16 to vector<512x1xbf16>
    %27 = tpu.concatenate %9, %26 in 1 : vector<512x128xbf16>, vector<512x1xbf16> -> vector<512x129xbf16>
    %c0_15 = arith.constant 0 : index
    %c0_16 = arith.constant 0 : index
    %28 = vector.load %arg6[%c0_15, %c0_16] : memref<8x128xf32, #tpu.memory_space<vmem>>, vector<8x128xf32>
    %29 = vector.extract_strided_slice %25 {offsets = [0, 0], sizes = [256, 8], strides = [1, 1]} : vector<512x8xbf16> to vector<256x8xbf16>
    %30 = vector.extract_strided_slice %27 {offsets = [0, 0], sizes = [256, 129], strides = [1, 1]} : vector<512x129xbf16> to vector<256x129xbf16>
    %cst_17 = arith.constant dense<0.000000e+00> : vector<8x129xf32>
    %31 = tpu.matmul %29, %30, %cst_17 {dimension_numbers = #tpu.dot_dimension_numbers<[0], [0], [1], [1], [0, 1, 1, 1], [], []>} : vector<256x8xbf16>, vector<256x129xbf16>, vector<8x129xf32> -> vector<8x129xf32>
    %32 = vector.extract_strided_slice %31 {offsets = [0, 0], sizes = [8, 128], strides = [1, 1]} : vector<8x129xf32> to vector<8x128xf32>
    %33 = vector.extract_strided_slice %31 {offsets = [0, 128], sizes = [8, 1], strides = [1, 1]} : vector<8x129xf32> to vector<8x1xf32>
    %34 = vector.broadcast %33 : vector<8x1xf32> to vector<8x128xf32>
    %35 = arith.mulf %34, %28 : vector<8x128xf32>
    %36 = arith.subf %32, %35 : vector<8x128xf32>
    %37 = arith.mulf %36, %36 : vector<8x128xf32>
    %cst_18 = arith.constant dense<0.000000e+00> : vector<8xf32>
    %38 = vector.multi_reduction <add>, %37, %cst_18 [1] : vector<8x128xf32> to vector<8xf32>
    %39 = vector.shape_cast %38 : vector<8xf32> to vector<8x1xf32>
    %cst_19 = arith.constant 9.99999996E-13 : f32
    %40 = vector.broadcast %cst_19 : f32 to vector<8x1xf32>
    %41 = arith.addf %39, %40 : vector<8x1xf32>
    %42 = math.rsqrt %41 : vector<8x1xf32>
    %43 = vector.broadcast %42 : vector<8x1xf32> to vector<8x128xf32>
    %44 = arith.mulf %36, %43 : vector<8x128xf32>
    %45 = arith.mulf %44, %44 : vector<8x128xf32>
    %46 = vector.shape_cast %45 : vector<8x128xf32> to vector<1x8x128xf32>
    %cst_20 = arith.constant dense<0.000000e+00> : vector<1xf32>
    %47 = vector.multi_reduction <add>, %46, %cst_20 [1, 2] : vector<1x8x128xf32> to vector<1xf32>
    %48 = vector.shape_cast %47 : vector<1xf32> to vector<1x1x1xf32>
    %49 = vector.extract %48[0, 0, 0] : f32 from vector<1x1x1xf32>
    %cst_21 = arith.constant 9.99999996E-13 : f32
    %50 = arith.addf %49, %cst_21 : f32
    %51 = math.rsqrt %50 : f32
    %52 = vector.broadcast %51 : f32 to vector<8x128xf32>
    %53 = arith.mulf %44, %52 : vector<8x128xf32>
    %c0_22 = arith.constant 0 : index
    %c0_23 = arith.constant 0 : index
    %c0_24 = arith.constant 0 : index
    %54 = vector.load %arg7[%c0_22, %c0_23, %c0_24] : memref<2x8x128xf32, #tpu.memory_space<vmem>>, vector<1x8x128xf32>
    %55 = vector.shape_cast %54 : vector<1x8x128xf32> to vector<8x128xf32>
    %56 = vector.shape_cast %53 : vector<8x128xf32> to vector<1x8x128xf32>
    tpu.vector_store %arg7[%c0_22, %c0_23, %c0_24], %56 {strides = array<i32>} : memref<2x8x128xf32, #tpu.memory_space<vmem>>, vector<1x8x128xf32>,
    %57 = vector.extract_strided_slice %25 {offsets = [256, 0], sizes = [256, 8], strides = [1, 1]} : vector<512x8xbf16> to vector<256x8xbf16>
    %58 = vector.extract_strided_slice %27 {offsets = [256, 0], sizes = [256, 129], strides = [1, 1]} : vector<512x129xbf16> to vector<256x129xbf16>
    %cst_25 = arith.constant dense<0.000000e+00> : vector<8x129xf32>
    %59 = tpu.matmul %57, %58, %cst_25 {dimension_numbers = #tpu.dot_dimension_numbers<[0], [0], [1], [1], [0, 1, 1, 1], [], []>} : vector<256x8xbf16>, vector<256x129xbf16>, vector<8x129xf32> -> vector<8x129xf32>
    %60 = vector.extract_strided_slice %59 {offsets = [0, 0], sizes = [8, 128], strides = [1, 1]} : vector<8x129xf32> to vector<8x128xf32>
    %61 = vector.extract_strided_slice %59 {offsets = [0, 128], sizes = [8, 1], strides = [1, 1]} : vector<8x129xf32> to vector<8x1xf32>
    %62 = vector.broadcast %61 : vector<8x1xf32> to vector<8x128xf32>
    %63 = arith.mulf %62, %28 : vector<8x128xf32>
    %64 = arith.subf %60, %63 : vector<8x128xf32>
    %65 = arith.mulf %64, %64 : vector<8x128xf32>
    %cst_26 = arith.constant dense<0.000000e+00> : vector<8xf32>
    %66 = vector.multi_reduction <add>, %65, %cst_26 [1] : vector<8x128xf32> to vector<8xf32>
    %67 = vector.shape_cast %66 : vector<8xf32> to vector<8x1xf32>
    %cst_27 = arith.constant 9.99999996E-13 : f32
    %68 = vector.broadcast %cst_27 : f32 to vector<8x1xf32>
    %69 = arith.addf %67, %68 : vector<8x1xf32>
    %70 = math.rsqrt %69 : vector<8x1xf32>
    %71 = vector.broadcast %70 : vector<8x1xf32> to vector<8x128xf32>
    %72 = arith.mulf %64, %71 : vector<8x128xf32>
    %73 = arith.mulf %72, %72 : vector<8x128xf32>
    %74 = vector.shape_cast %73 : vector<8x128xf32> to vector<1x8x128xf32>
    %cst_28 = arith.constant dense<0.000000e+00> : vector<1xf32>
    %75 = vector.multi_reduction <add>, %74, %cst_28 [1, 2] : vector<1x8x128xf32> to vector<1xf32>
    %76 = vector.shape_cast %75 : vector<1xf32> to vector<1x1x1xf32>
    %77 = vector.extract %76[0, 0, 0] : f32 from vector<1x1x1xf32>
    %cst_29 = arith.constant 9.99999996E-13 : f32
    %78 = arith.addf %77, %cst_29 : f32
    %79 = math.rsqrt %78 : f32
    %80 = vector.broadcast %79 : f32 to vector<8x128xf32>
    %81 = arith.mulf %72, %80 : vector<8x128xf32>
    %c1 = arith.constant 1 : index
    %c0_30 = arith.constant 0 : index
    %c0_31 = arith.constant 0 : index
    %82 = vector.load %arg7[%c1, %c0_30, %c0_31] : memref<2x8x128xf32, #tpu.memory_space<vmem>>, vector<1x8x128xf32>
    %83 = vector.shape_cast %82 : vector<1x8x128xf32> to vector<8x128xf32>
    %84 = vector.shape_cast %81 : vector<8x128xf32> to vector<1x8x128xf32>
    tpu.vector_store %arg7[%c1, %c0_30, %c0_31], %84 {strides = array<i32>} : memref<2x8x128xf32, #tpu.memory_space<vmem>>, vector<1x8x128xf32>,
    return
  }
  func.func @transform_0(%arg0: i32) -> (i32, i32, i32) {
    %c0_i32 = arith.constant 0 : i32
    %c0_i32_0 = arith.constant 0 : i32
    %c0_i32_1 = arith.constant 0 : i32
    return %arg0, %c0_i32, %c0_i32_0 : i32, i32, i32
  }
  func.func @transform_1(%arg0: i32) -> (i32, i32) {
    %c0_i32 = arith.constant 0 : i32
    %c0_i32_0 = arith.constant 0 : i32
    %c0_i32_1 = arith.constant 0 : i32
    return %c0_i32, %c0_i32_0 : i32, i32
  }
  func.func @transform_2(%arg0: i32) -> (i32, i32) {
    %c0_i32 = arith.constant 0 : i32
    %c0_i32_0 = arith.constant 0 : i32
    %c0_i32_1 = arith.constant 0 : i32
    return %c0_i32, %c0_i32_0 : i32, i32
  }
  func.func @transform_3(%arg0: i32) -> (i32, i32) {
    %c0_i32 = arith.constant 0 : i32
    %c0_i32_0 = arith.constant 0 : i32
    %c0_i32_1 = arith.constant 0 : i32
    return %c0_i32, %c0_i32_0 : i32, i32
  }
  func.func @transform_4(%arg0: i32) -> (i32, i32) {
    %c0_i32 = arith.constant 0 : i32
    %c0_i32_0 = arith.constant 0 : i32
    %c0_i32_1 = arith.constant 0 : i32
    return %c0_i32, %c0_i32_0 : i32, i32
  }
  func.func @transform_5(%arg0: i32) -> (i32, i32) {
    %c0_i32 = arith.constant 0 : i32
    %c0_i32_0 = arith.constant 0 : i32
    %c0_i32_1 = arith.constant 0 : i32
    return %c0_i32, %c0_i32_0 : i32, i32
  }
  func.func @transform_6(%arg0: i32) -> (i32, i32, i32) {
    %c0_i32 = arith.constant 0 : i32
    %c0_i32_0 = arith.constant 0 : i32
    %c0_i32_1 = arith.constant 0 : i32
    return %arg0, %c0_i32, %c0_i32_0 : i32, i32, i32
  }
}

</mosaic_0001>

<llo_original>
// kernel: tpu_custom_call.1
$region0: #{tpu_custom_call.1}
  #allocation0 [shape = 'u32[]', space=smem, size = 0x4, offset = 0x4, fixed_abs, tag = 'smem constant byte address 0x4 - core index']
  #allocation1 [shape = 'u32[144,128]{1,0:T(1,128)}', space=vmem, size = 0x12000, scoped, tag = 'internal scratch']
  %s0 = inlined_call_operand.vmem [shape: bf16[2,256,64], index: 0, kind: input, shape index: {}]
  %s1 = inlined_call_operand.vmem [shape: bf16[64,128], index: 1, kind: input, shape index: {}]
  %s2 = inlined_call_operand.vmem [shape: f32[1,128], index: 2, kind: input, shape index: {}]
  %s3 = inlined_call_operand.vmem [shape: bf16[128,8], index: 3, kind: input, shape index: {}]
  %s4 = inlined_call_operand.vmem [shape: f32[1,8], index: 4, kind: input, shape index: {}]
  %s5 = inlined_call_operand.vmem [shape: f32[8,128], index: 5, kind: input, shape index: {}]
  %s6 = inlined_call_operand.hbm [shape: f32[2,8,128], index: 6, kind: output, shape index: {}]
  %s7 = sld [smem:[#allocation0]]
  $region34: #{tpu_custom_call.1} parent=0
    _
  %s9 = ssub.s32 1, %s7
  %s10 = scalar_select 0, %s9, %s7
  $region1: #{tpu_custom_call.1} parent=0
    #allocation2 [shape = 'u8[8192]{0}', space=vmem, size = 0x2000, scoped, tag = 'output window, operand 0, single buffered']
    #allocation3 [shape = 's32[1]{0}', space=sflag, size = 0x4, scoped, tag = 'scoped memory for tpu_custom_call.1']
    %11 = vsyncpa [#allocation3], 0
    // Predicated region
    $region2: #{tpu_custom_call.1} parent=1 // pred_check
      _
    $region3: #{tpu_custom_call.1} parent=1 // pred_check_branch
      %13 = sbr.rel (0) target = $region5
    $region4: #{tpu_custom_call.1} parent=1 // pred_region
      _
    $region5: #{tpu_custom_call.1} parent=1 // pred_fallthru
      _
    // Predicated region
    $region6: #{tpu_custom_call.1} parent=1 // pred_check
      _
    $region7: #{tpu_custom_call.1} parent=1 // pred_check_branch
      %15 = sbr.rel (0) target = $region9
    $region8: #{tpu_custom_call.1} parent=1 // pred_region
      _
    $region9: #{tpu_custom_call.1} parent=1 // pred_fallthru
      _
    // Predicated region
    $region10: #{tpu_custom_call.1} parent=1 // pred_check
      _
    $region11: #{tpu_custom_call.1} parent=1 // pred_check_branch
      %17 = sbr.rel (0) target = $region13
    $region12: #{tpu_custom_call.1} parent=1 // pred_region
      _
    $region13: #{tpu_custom_call.1} parent=1 // pred_fallthru
      _
    // Predicated region
    $region14: #{tpu_custom_call.1} parent=1 // pred_check
      _
    $region15: #{tpu_custom_call.1} parent=1 // pred_check_branch
      %19 = sbr.rel (0) target = $region17
    $region16: #{tpu_custom_call.1} parent=1 // pred_region
      _
    $region17: #{tpu_custom_call.1} parent=1 // pred_fallthru
      _
    // Predicated region
    $region18: #{tpu_custom_call.1} parent=1 // pred_check
      _
    $region19: #{tpu_custom_call.1} parent=1 // pred_check_branch
      %21 = sbr.rel (0) target = $region21
    $region20: #{tpu_custom_call.1} parent=1 // pred_region
      _
    $region21: #{tpu_custom_call.1} parent=1 // pred_fallthru
      _
    // Predicated region
    $region22: #{tpu_custom_call.1} parent=1 // pred_check
      _
    $region23: #{tpu_custom_call.1} parent=1 // pred_check_branch
      %23 = sbr.rel (0) target = $region25
    $region24: #{tpu_custom_call.1} parent=1 // pred_region
      _
    $region25: #{tpu_custom_call.1} parent=1 // pred_fallthru
      _
    %v26 = vld [vmem:[%s0] sm:$0xf]
    %v27 = vld [vmem:[%s0 + $0x4] sm:$0xf]
    %v28 = vld [vmem:[%s0 + $0x8] sm:$0xf]
    %v29 = vld [vmem:[%s0 + $0xc] sm:$0xf]
    %v30 = vld [vmem:[%s0 + $0x10] sm:$0xf]
    %v31 = vld [vmem:[%s0 + $0x14] sm:$0xf]
    %v32 = vld [vmem:[%s0 + $0x18] sm:$0xf]
    %v33 = vld [vmem:[%s0 + $0x1c] sm:$0xf]
    %v34 = vld [vmem:[%s0 + $0x20] sm:$0xf]
    %v35 = vld [vmem:[%s0 + $0x24] sm:$0xf]
    %v36 = vld [vmem:[%s0 + $0x28] sm:$0xf]
    %v37 = vld [vmem:[%s0 + $0x2c] sm:$0xf]
    %v38 = vld [vmem:[%s0 + $0x30] sm:$0xf]
    %v39 = vld [vmem:[%s0 + $0x34] sm:$0xf]
    %v40 = vld [vmem:[%s0 + $0x38] sm:$0xf]
    %v41 = vld [vmem:[%s0 + $0x3c] sm:$0xf]
    %v42 = vld [vmem:[%s0 + $0x40] sm:$0xf]
    %v43 = vld [vmem:[%s0 + $0x44] sm:$0xf]
    %v44 = vld [vmem:[%s0 + $0x48] sm:$0xf]
    %v45 = vld [vmem:[%s0 + $0x4c] sm:$0xf]
    %v46 = vld [vmem:[%s0 + $0x50] sm:$0xf]
    %v47 = vld [vmem:[%s0 + $0x54] sm:$0xf]
    %v48 = vld [vmem:[%s0 + $0x58] sm:$0xf]
    %v49 = vld [vmem:[%s0 + $0x5c] sm:$0xf]
    %v50 = vld [vmem:[%s0 + $0x60] sm:$0xf]
    %v51 = vld [vmem:[%s0 + $0x64] sm:$0xf]
    %v52 = vld [vmem:[%s0 + $0x68] sm:$0xf]
    %v53 = vld [vmem:[%s0 + $0x6c] sm:$0xf]
    %v54 = vld [vmem:[%s0 + $0x70] sm:$0xf]
    %v55 = vld [vmem:[%s0 + $0x74] sm:$0xf]
    %v56 = vld [vmem:[%s0 + $0x78] sm:$0xf]
    %v57 = vld [vmem:[%s0 + $0x7c] sm:$0xf]
    %v58 = vld [vmem:[%s0 + $0x80] sm:$0xf]
    %v59 = vld [vmem:[%s0 + $0x84] sm:$0xf]
    %v60 = vld [vmem:[%s0 + $0x88] sm:$0xf]
    %v61 = vld [vmem:[%s0 + $0x8c] sm:$0xf]
    %v62 = vld [vmem:[%s0 + $0x90] sm:$0xf]
    %v63 = vld [vmem:[%s0 + $0x94] sm:$0xf]
    %v64 = vld [vmem:[%s0 + $0x98] sm:$0xf]
    %v65 = vld [vmem:[%s0 + $0x9c] sm:$0xf]
    %v66 = vld [vmem:[%s0 + $0xa0] sm:$0xf]
    %v67 = vld [vmem:[%s0 + $0xa4] sm:$0xf]
    %v68 = vld [vmem:[%s0 + $0xa8] sm:$0xf]
    %v69 = vld [vmem:[%s0 + $0xac] sm:$0xf]
    %v70 = vld [vmem:[%s0 + $0xb0] sm:$0xf]
    %v71 = vld [vmem:[%s0 + $0xb4] sm:$0xf]
    %v72 = vld [vmem:[%s0 + $0xb8] sm:$0xf]
    %v73 = vld [vmem:[%s0 + $0xbc] sm:$0xf]
    %v74 = vld [vmem:[%s0 + $0xc0] sm:$0xf]
    %v75 = vld [vmem:[%s0 + $0xc4] sm:$0xf]
    %v76 = vld [vmem:[%s0 + $0xc8] sm:$0xf]
    %v77 = vld [vmem:[%s0 + $0xcc] sm:$0xf]
    %v78 = vld [vmem:[%s0 + $0xd0] sm:$0xf]
    %v79 = vld [vmem:[%s0 + $0xd4] sm:$0xf]
    %v80 = vld [vmem:[%s0 + $0xd8] sm:$0xf]
    %v81 = vld [vmem:[%s0 + $0xdc] sm:$0xf]
    %v82 = vld [vmem:[%s0 + $0xe0] sm:$0xf]
    %v83 = vld [vmem:[%s0 + $0xe4] sm:$0xf]
    %v84 = vld [vmem:[%s0 + $0xe8] sm:$0xf]
    %v85 = vld [vmem:[%s0 + $0xec] sm:$0xf]
    %v86 = vld [vmem:[%s0 + $0xf0] sm:$0xf]
    %v87 = vld [vmem:[%s0 + $0xf4] sm:$0xf]
    %v88 = vld [vmem:[%s0 + $0xf8] sm:$0xf]
    %v89 = vld [vmem:[%s0 + $0xfc] sm:$0xf]
    %v90 = vld [vmem:[%s1] sm:$0xf]
    %v91 = vld [vmem:[%s1 + $0x4] sm:$0xf]
    %v92 = vld [vmem:[%s1 + $0x8] sm:$0xf]
    %v93 = vld [vmem:[%s1 + $0xc] sm:$0xf]
    %v94 = vld [vmem:[%s1 + $0x10] sm:$0xf]
    %v95 = vld [vmem:[%s1 + $0x14] sm:$0xf]
    %v96 = vld [vmem:[%s1 + $0x18] sm:$0xf]
    %v97 = vld [vmem:[%s1 + $0x1c] sm:$0xf]
    %v98 = vld [vmem:[%s2] sm:$0x1]
    %v100 = vlaneseq
    %v101 = vshrl.u32 %v100, 7
    %v102 = vsub.s32 0, %v101
    %v103 = vrot.slane %v98, %v102
    %v169 = vunpack.c.l.b16 %v26
    %v170 = vunpack.c.l.b16 %v27
    %v171 = vunpack.c.l.b16 %v28
    %v172 = vunpack.c.l.b16 %v29
    %v173 = vunpack.c.l.b16 %v30
    %v174 = vunpack.c.l.b16 %v31
    %v175 = vunpack.c.l.b16 %v32
    %v176 = vunpack.c.l.b16 %v33
    %v177 = vunpack.c.l.b16 %v34
    %v178 = vunpack.c.l.b16 %v35
    %v179 = vunpack.c.l.b16 %v36
    %v180 = vunpack.c.l.b16 %v37
    %v181 = vunpack.c.l.b16 %v38
    %v182 = vunpack.c.l.b16 %v39
    %v183 = vunpack.c.l.b16 %v40
    %v184 = vunpack.c.l.b16 %v41
    %v185 = vunpack.c.l.b16 %v42
    %v186 = vunpack.c.l.b16 %v43
    %v187 = vunpack.c.l.b16 %v44
    %v188 = vunpack.c.l.b16 %v45
    %v189 = vunpack.c.l.b16 %v46
    %v190 = vunpack.c.l.b16 %v47
    %v191 = vunpack.c.l.b16 %v48
    %v192 = vunpack.c.l.b16 %v49
    %v193 = vunpack.c.l.b16 %v50
    %v194 = vunpack.c.l.b16 %v51
    %v195 = vunpack.c.l.b16 %v52
    %v196 = vunpack.c.l.b16 %v53
    %v197 = vunpack.c.l.b16 %v54
    %v198 = vunpack.c.l.b16 %v55
    %v199 = vunpack.c.l.b16 %v56
    %v200 = vunpack.c.l.b16 %v57
    %v201 = vunpack.c.l.b16 %v58
    %v202 = vunpack.c.l.b16 %v59
    %v203 = vunpack.c.l.b16 %v60
    %v204 = vunpack.c.l.b16 %v61
    %v205 = vunpack.c.l.b16 %v62
    %v206 = vunpack.c.l.b16 %v63
    %v207 = vunpack.c.l.b16 %v64
    %v208 = vunpack.c.l.b16 %v65
    %v209 = vunpack.c.l.b16 %v66
    %v210 = vunpack.c.l.b16 %v67
    %v211 = vunpack.c.l.b16 %v68
    %v212 = vunpack.c.l.b16 %v69
    %v213 = vunpack.c.l.b16 %v70
    %v214 = vunpack.c.l.b16 %v71
    %v215 = vunpack.c.l.b16 %v72
    %v216 = vunpack.c.l.b16 %v73
    %v217 = vunpack.c.l.b16 %v74
    %v218 = vunpack.c.l.b16 %v75
    %v219 = vunpack.c.l.b16 %v76
    %v220 = vunpack.c.l.b16 %v77
    %v221 = vunpack.c.l.b16 %v78
    %v222 = vunpack.c.l.b16 %v79
    %v223 = vunpack.c.l.b16 %v80
    %v224 = vunpack.c.l.b16 %v81
    %v225 = vunpack.c.l.b16 %v82
    %v226 = vunpack.c.l.b16 %v83
    %v227 = vunpack.c.l.b16 %v84
    %v228 = vunpack.c.l.b16 %v85
    %v229 = vunpack.c.l.b16 %v86
    %v230 = vunpack.c.l.b16 %v87
    %v231 = vunpack.c.l.b16 %v88
    %v232 = vunpack.c.l.b16 %v89
    %v233 = vpack.c.b16 %v170, %v169
    %v234 = vpack.c.b16 %v172, %v171
    %v235 = vpack.c.b16 %v174, %v173
    %v236 = vpack.c.b16 %v176, %v175
    %v237 = vpack.c.b16 %v178, %v177
    %v238 = vpack.c.b16 %v180, %v179
    %v239 = vpack.c.b16 %v182, %v181
    %v240 = vpack.c.b16 %v184, %v183
    %v241 = vpack.c.b16 %v186, %v185
    %v242 = vpack.c.b16 %v188, %v187
    %v243 = vpack.c.b16 %v190, %v189
    %v244 = vpack.c.b16 %v192, %v191
    %v245 = vpack.c.b16 %v194, %v193
    %v246 = vpack.c.b16 %v196, %v195
    %v247 = vpack.c.b16 %v198, %v197
    %v248 = vpack.c.b16 %v200, %v199
    %v249 = vpack.c.b16 %v202, %v201
    %v250 = vpack.c.b16 %v204, %v203
    %v251 = vpack.c.b16 %v206, %v205
    %v252 = vpack.c.b16 %v208, %v207
    %v253 = vpack.c.b16 %v210, %v209
    %v254 = vpack.c.b16 %v212, %v211
    %v255 = vpack.c.b16 %v214, %v213
    %v256 = vpack.c.b16 %v216, %v215
    %v257 = vpack.c.b16 %v218, %v217
    %v258 = vpack.c.b16 %v220, %v219
    %v259 = vpack.c.b16 %v222, %v221
    %v260 = vpack.c.b16 %v224, %v223
    %v261 = vpack.c.b16 %v226, %v225
    %v262 = vpack.c.b16 %v228, %v227
    %v263 = vpack.c.b16 %v230, %v229
    %v264 = vpack.c.b16 %v232, %v231
    %v273 = vunpack.c.l.b16 %v90
    %v274 = vunpack.c.l.b16 %v91
    %v275 = vunpack.c.l.b16 %v92
    %v276 = vunpack.c.l.b16 %v93
    %v277 = vunpack.c.l.b16 %v94
    %v278 = vunpack.c.l.b16 %v95
    %v279 = vunpack.c.l.b16 %v96
    %v280 = vunpack.c.l.b16 %v97
    %v281 = vpack.c.b16 %v274, %v273
    %v282 = vpack.c.b16 %v276, %v275
    %v283 = vpack.c.b16 %v278, %v277
    %v284 = vpack.c.b16 %v280, %v279
    %vm289 = vcmask 523264
    %v291 = vsel %vm289, %v233, 0
    %v294 = vsel %vm289, %v234, 0
    %v297 = vsel %vm289, %v235, 0
    %v300 = vsel %vm289, %v236, 0
    %v303 = vsel %vm289, %v237, 0
    %v306 = vsel %vm289, %v238, 0
    %v309 = vsel %vm289, %v239, 0
    %v312 = vsel %vm289, %v240, 0
    %v315 = vsel %vm289, %v241, 0
    %v318 = vsel %vm289, %v242, 0
    %v321 = vsel %vm289, %v243, 0
    %v324 = vsel %vm289, %v244, 0
    %v327 = vsel %vm289, %v245, 0
    %v330 = vsel %vm289, %v246, 0
    %v333 = vsel %vm289, %v247, 0
    %v336 = vsel %vm289, %v248, 0
    %v339 = vsel %vm289, %v249, 0
    %v342 = vsel %vm289, %v250, 0
    %v345 = vsel %vm289, %v251, 0
    %v348 = vsel %vm289, %v252, 0
    %v351 = vsel %vm289, %v253, 0
    %v354 = vsel %vm289, %v254, 0
    %v357 = vsel %vm289, %v255, 0
    %v360 = vsel %vm289, %v256, 0
    %v363 = vsel %vm289, %v257, 0
    %v366 = vsel %vm289, %v258, 0
    %v369 = vsel %vm289, %v259, 0
    %v372 = vsel %vm289, %v260, 0
    %v375 = vsel %vm289, %v261, 0
    %v378 = vsel %vm289, %v262, 0
    %v381 = vsel %vm289, %v263, 0
    %v384 = vsel %vm289, %v264, 0
    %386 = vmatprep.subr.bf16.mxu0 0
    %387 = vmatpush1.bf16.msra.mxu0 %v281
    %388 = vmatprep.subr.bf16.mxu0 0
    %389 = vmatpush1.bf16.msra.mxu0 %v282
    %390 = vmatprep.subr.bf16.mxu0 0
    %391 = vmatpush1.bf16.msra.mxu0 %v283
    %392 = vmatprep.subr.bf16.mxu0 0
    %393 = vmatpush1.bf16.msra.mxu0 %v284
    %394 = vmatprep.subr.bf16.mxu0 0
    %395 = vmatpush1.bf16.msra.mxu0 0
    %396 = vmatprep.subr.bf16.mxu0 0
    %397 = vmatpush1.bf16.msra.mxu0 0
    %398 = vmatprep.subr.bf16.mxu0 0
    %399 = vmatpush1.bf16.msra.mxu0 0
    %400 = vmatprep.subr.bf16.mxu0 0
    %401 = vmatpush1.bf16.msra.mxu0 0
    %402 = vmatprep.subr.bf16.mxu0 0
    %403 = vmatpush1.bf16.msra.mxu0 0
    %404 = vmatprep.subr.bf16.mxu0 0
    %405 = vmatpush1.bf16.msra.mxu0 0
    %406 = vmatprep.subr.bf16.mxu0 0
    %407 = vmatpush1.bf16.msra.mxu0 0
    %408 = vmatprep.subr.bf16.mxu0 0
    %409 = vmatpush1.bf16.msra.mxu0 0
    %410 = vmatprep.subr.bf16.mxu0 0
    %411 = vmatpush1.bf16.msra.mxu0 0
    %412 = vmatprep.subr.bf16.mxu0 0
    %413 = vmatpush1.bf16.msra.mxu0 0
    %414 = vmatprep.subr.bf16.mxu0 0
    %415 = vmatpush1.bf16.msra.mxu0 0
    %416 = vmatprep.subr.bf16.mxu0 0
    %417 = vmatpush1.bf16.msra.mxu0 0
    %418 = vmatprep.mubr.bf16.mxu0 0
    %419 = vmatmul.mubr.bf16.gmra.mrb[0].mxu0 %v291
    %v420 = vpop.f32.mrb[0].mxu0
    %v421 = vadd.f32 %v103, %v420
    %v422 = vpop.f32.mrb[0].mxu0
    %v423 = vpop.f32.mrb[0].mxu0
    %v424 = vadd.f32 %v103, %v423
    %v425 = vpop.f32.mrb[0].mxu0
    %426 = vmatprep.mubr.bf16.mxu0 0
    %427 = vmatmul.mubr.bf16.gmra.mrb[0].mxu0 %v294
    %v428 = vpop.f32.mrb[0].mxu0
    %v429 = vadd.f32 %v103, %v428
    %v430 = vpop.f32.mrb[0].mxu0
    %v431 = vpop.f32.mrb[0].mxu0
    %v432 = vadd.f32 %v103, %v431
    %v433 = vpop.f32.mrb[0].mxu0
    %434 = vmatprep.mubr.bf16.mxu0 0
    %435 = vmatmul.mubr.bf16.gmra.mrb[0].mxu0 %v297
    %v436 = vpop.f32.mrb[0].mxu0
    %v437 = vadd.f32 %v103, %v436
    %v438 = vpop.f32.mrb[0].mxu0
    %v439 = vpop.f32.mrb[0].mxu0
    %v440 = vadd.f32 %v103, %v439
    %v441 = vpop.f32.mrb[0].mxu0
    %442 = vmatprep.mubr.bf16.mxu0 0
    %443 = vmatmul.mubr.bf16.gmra.mrb[0].mxu0 %v300
    %v444 = vpop.f32.mrb[0].mxu0
    %v445 = vadd.f32 %v103, %v444
    %v446 = vpop.f32.mrb[0].mxu0
    %v447 = vpop.f32.mrb[0].mxu0
    %v448 = vadd.f32 %v103, %v447
    %v449 = vpop.f32.mrb[0].mxu0
    %450 = vmatprep.mubr.bf16.mxu0 0
    %451 = vmatmul.mubr.bf16.gmra.mrb[0].mxu0 %v303
    %v452 = vpop.f32.mrb[0].mxu0
    %v453 = vadd.f32 %v103, %v452
    %v454 = vpop.f32.mrb[0].mxu0
    %v455 = vpop.f32.mrb[0].mxu0
    %v456 = vadd.f32 %v103, %v455
    %v457 = vpop.f32.mrb[0].mxu0
    %458 = vmatprep.mubr.bf16.mxu0 0
    %459 = vmatmul.mubr.bf16.gmra.mrb[0].mxu0 %v306
    %v460 = vpop.f32.mrb[0].mxu0
    %v461 = vadd.f32 %v103, %v460
    %v462 = vpop.f32.mrb[0].mxu0
    %v463 = vpop.f32.mrb[0].mxu0
    %v464 = vadd.f32 %v103, %v463
    %v465 = vpop.f32.mrb[0].mxu0
    %466 = vmatprep.mubr.bf16.mxu0 0
    %467 = vmatmul.mubr.bf16.gmra.mrb[0].mxu0 %v309
    %v468 = vpop.f32.mrb[0].mxu0
    %v469 = vadd.f32 %v103, %v468
    %v470 = vpop.f32.mrb[0].mxu0
    %v471 = vpop.f32.mrb[0].mxu0
    %v472 = vadd.f32 %v103, %v471
    %v473 = vpop.f32.mrb[0].mxu0
    %474 = vmatprep.mubr.bf16.mxu0 0
    %475 = vmatmul.mubr.bf16.gmra.mrb[0].mxu0 %v312
    %v476 = vpop.f32.mrb[0].mxu0
    %v477 = vadd.f32 %v103, %v476
    %v478 = vpop.f32.mrb[0].mxu0
    %v479 = vpop.f32.mrb[0].mxu0
    %v480 = vadd.f32 %v103, %v479
    %v481 = vpop.f32.mrb[0].mxu0
    %482 = vmatprep.mubr.bf16.mxu0 0
    %483 = vmatmul.mubr.bf16.gmra.mrb[0].mxu0 %v315
    %v484 = vpop.f32.mrb[0].mxu0
    %v485 = vadd.f32 %v103, %v484
    %v486 = vpop.f32.mrb[0].mxu0
    %v487 = vpop.f32.mrb[0].mxu0
    %v488 = vadd.f32 %v103, %v487
    %v489 = vpop.f32.mrb[0].mxu0
    %490 = vmatprep.mubr.bf16.mxu0 0
    %491 = vmatmul.mubr.bf16.gmra.mrb[0].mxu0 %v318
    %v492 = vpop.f32.mrb[0].mxu0
    %v493 = vadd.f32 %v103, %v492
    %v494 = vpop.f32.mrb[0].mxu0
    %v495 = vpop.f32.mrb[0].mxu0
    %v496 = vadd.f32 %v103, %v495
    %v497 = vpop.f32.mrb[0].mxu0
    %498 = vmatprep.mubr.bf16.mxu0 0
    %499 = vmatmul.mubr.bf16.gmra.mrb[0].mxu0 %v321
    %v500 = vpop.f32.mrb[0].mxu0
    %v501 = vadd.f32 %v103, %v500
    %v502 = vpop.f32.mrb[0].mxu0
    %v503 = vpop.f32.mrb[0].mxu0
    %v504 = vadd.f32 %v103, %v503
    %v505 = vpop.f32.mrb[0].mxu0
    %506 = vmatprep.mubr.bf16.mxu0 0
    %507 = vmatmul.mubr.bf16.gmra.mrb[0].mxu0 %v324
    %v508 = vpop.f32.mrb[0].mxu0
    %v509 = vadd.f32 %v103, %v508
    %v510 = vpop.f32.mrb[0].mxu0
    %v511 = vpop.f32.mrb[0].mxu0
    %v512 = vadd.f32 %v103, %v511
    %v513 = vpop.f32.mrb[0].mxu0
    %514 = vmatprep.mubr.bf16.mxu0 0
    %515 = vmatmul.mubr.bf16.gmra.mrb[0].mxu0 %v327
    %v516 = vpop.f32.mrb[0].mxu0
    %v517 = vadd.f32 %v103, %v516
    %v518 = vpop.f32.mrb[0].mxu0
    %v519 = vpop.f32.mrb[0].mxu0
    %v520 = vadd.f32 %v103, %v519
    %v521 = vpop.f32.mrb[0].mxu0
    %522 = vmatprep.mubr.bf16.mxu0 0
    %523 = vmatmul.mubr.bf16.gmra.mrb[0].mxu0 %v330
    %v524 = vpop.f32.mrb[0].mxu0
    %v525 = vadd.f32 %v103, %v524
    %v526 = vpop.f32.mrb[0].mxu0
    %v527 = vpop.f32.mrb[0].mxu0
    %v528 = vadd.f32 %v103, %v527
    %v529 = vpop.f32.mrb[0].mxu0
    %530 = vmatprep.mubr.bf16.mxu0 0
    %531 = vmatmul.mubr.bf16.gmra.mrb[0].mxu0 %v333
    %v532 = vpop.f32.mrb[0].mxu0
    %v533 = vadd.f32 %v103, %v532
    %v534 = vpop.f32.mrb[0].mxu0
    %v535 = vpop.f32.mrb[0].mxu0
    %v536 = vadd.f32 %v103, %v535
    %v537 = vpop.f32.mrb[0].mxu0
    %538 = vmatprep.mubr.bf16.mxu0 0
    %539 = vmatmul.mubr.bf16.gmra.mrb[0].mxu0 %v336
    %v540 = vpop.f32.mrb[0].mxu0
    %v541 = vadd.f32 %v103, %v540
    %v542 = vpop.f32.mrb[0].mxu0
    %v543 = vpop.f32.mrb[0].mxu0
    %v544 = vadd.f32 %v103, %v543
    %v545 = vpop.f32.mrb[0].mxu0
    %546 = vmatprep.mubr.bf16.mxu0 0
    %547 = vmatmul.mubr.bf16.gmra.mrb[0].mxu0 %v339
    %v548 = vpop.f32.mrb[0].mxu0
    %v549 = vadd.f32 %v103, %v548
    %v550 = vpop.f32.mrb[0].mxu0
    %v551 = vpop.f32.mrb[0].mxu0
    %v552 = vadd.f32 %v103, %v551
    %v553 = vpop.f32.mrb[0].mxu0
    %554 = vmatprep.mubr.bf16.mxu0 0
    %555 = vmatmul.mubr.bf16.gmra.mrb[0].mxu0 %v342
    %v556 = vpop.f32.mrb[0].mxu0
    %v557 = vadd.f32 %v103, %v556
    %v558 = vpop.f32.mrb[0].mxu0
    %v559 = vpop.f32.mrb[0].mxu0
    %v560 = vadd.f32 %v103, %v559
    %v561 = vpop.f32.mrb[0].mxu0
    %562 = vmatprep.mubr.bf16.mxu0 0
    %563 = vmatmul.mubr.bf16.gmra.mrb[0].mxu0 %v345
    %v564 = vpop.f32.mrb[0].mxu0
    %v565 = vadd.f32 %v103, %v564
    %v566 = vpop.f32.mrb[0].mxu0
    %v567 = vpop.f32.mrb[0].mxu0
    %v568 = vadd.f32 %v103, %v567
    %v569 = vpop.f32.mrb[0].mxu0
    %570 = vmatprep.mubr.bf16.mxu0 0
    %571 = vmatmul.mubr.bf16.gmra.mrb[0].mxu0 %v348
    %v572 = vpop.f32.mrb[0].mxu0
    %v573 = vadd.f32 %v103, %v572
    %v574 = vpop.f32.mrb[0].mxu0
    %v575 = vpop.f32.mrb[0].mxu0
    %v576 = vadd.f32 %v103, %v575
    %v577 = vpop.f32.mrb[0].mxu0
    %578 = vmatprep.mubr.bf16.mxu0 0
    %579 = vmatmul.mubr.bf16.gmra.mrb[0].mxu0 %v351
    %v580 = vpop.f32.mrb[0].mxu0
    %v581 = vadd.f32 %v103, %v580
    %v582 = vpop.f32.mrb[0].mxu0
    %v583 = vpop.f32.mrb[0].mxu0
    %v584 = vadd.f32 %v103, %v583
    %v585 = vpop.f32.mrb[0].mxu0
    %586 = vmatprep.mubr.bf16.mxu0 0
    %587 = vmatmul.mubr.bf16.gmra.mrb[0].mxu0 %v354
    %v588 = vpop.f32.mrb[0].mxu0
    %v589 = vadd.f32 %v103, %v588
    %v590 = vpop.f32.mrb[0].mxu0
    %v591 = vpop.f32.mrb[0].mxu0
    %v592 = vadd.f32 %v103, %v591
    %v593 = vpop.f32.mrb[0].mxu0
    %594 = vmatprep.mubr.bf16.mxu0 0
    %595 = vmatmul.mubr.bf16.gmra.mrb[0].mxu0 %v357
    %v596 = vpop.f32.mrb[0].mxu0
    %v597 = vadd.f32 %v103, %v596
    %v598 = vpop.f32.mrb[0].mxu0
    %v599 = vpop.f32.mrb[0].mxu0
    %v600 = vadd.f32 %v103, %v599
    %v601 = vpop.f32.mrb[0].mxu0
    %602 = vmatprep.mubr.bf16.mxu0 0
    %603 = vmatmul.mubr.bf16.gmra.mrb[0].mxu0 %v360
    %v604 = vpop.f32.mrb[0].mxu0
    %v605 = vadd.f32 %v103, %v604
    %v606 = vpop.f32.mrb[0].mxu0
    %v607 = vpop.f32.mrb[0].mxu0
    %v608 = vadd.f32 %v103, %v607
    %v609 = vpop.f32.mrb[0].mxu0
    %610 = vmatprep.mubr.bf16.mxu0 0
    %611 = vmatmul.mubr.bf16.gmra.mrb[0].mxu0 %v363
    %v612 = vpop.f32.mrb[0].mxu0
    %v613 = vadd.f32 %v103, %v612
    %v614 = vpop.f32.mrb[0].mxu0
    %v615 = vpop.f32.mrb[0].mxu0
    %v616 = vadd.f32 %v103, %v615
    %v617 = vpop.f32.mrb[0].mxu0
    %618 = vmatprep.mubr.bf16.mxu0 0
    %619 = vmatmul.mubr.bf16.gmra.mrb[0].mxu0 %v366
    %v620 = vpop.f32.mrb[0].mxu0
    %v621 = vadd.f32 %v103, %v620
    %v622 = vpop.f32.mrb[0].mxu0
    %v623 = vpop.f32.mrb[0].mxu0
    %v624 = vadd.f32 %v103, %v623
    %v625 = vpop.f32.mrb[0].mxu0
    %626 = vmatprep.mubr.bf16.mxu0 0
    %627 = vmatmul.mubr.bf16.gmra.mrb[0].mxu0 %v369
    %v628 = vpop.f32.mrb[0].mxu0
    %v629 = vadd.f32 %v103, %v628
    %v630 = vpop.f32.mrb[0].mxu0
    %v631 = vpop.f32.mrb[0].mxu0
    %v632 = vadd.f32 %v103, %v631
    %v633 = vpop.f32.mrb[0].mxu0
    %634 = vmatprep.mubr.bf16.mxu0 0
    %635 = vmatmul.mubr.bf16.gmra.mrb[0].mxu0 %v372
    %v636 = vpop.f32.mrb[0].mxu0
    %v637 = vadd.f32 %v103, %v636
    %v638 = vpop.f32.mrb[0].mxu0
    %v639 = vpop.f32.mrb[0].mxu0
    %v640 = vadd.f32 %v103, %v639
    %v641 = vpop.f32.mrb[0].mxu0
    %642 = vmatprep.mubr.bf16.mxu0 0
    %643 = vmatmul.mubr.bf16.gmra.mrb[0].mxu0 %v375
    %v644 = vpop.f32.mrb[0].mxu0
    %v645 = vadd.f32 %v103, %v644
    %v646 = vpop.f32.mrb[0].mxu0
    %v647 = vpop.f32.mrb[0].mxu0
    %v648 = vadd.f32 %v103, %v647
    %v649 = vpop.f32.mrb[0].mxu0
    %650 = vmatprep.mubr.bf16.mxu0 0
    %651 = vmatmul.mubr.bf16.gmra.mrb[0].mxu0 %v378
    %v652 = vpop.f32.mrb[0].mxu0
    %v653 = vadd.f32 %v103, %v652
    %v654 = vpop.f32.mrb[0].mxu0
    %v655 = vpop.f32.mrb[0].mxu0
    %v656 = vadd.f32 %v103, %v655
    %v657 = vpop.f32.mrb[0].mxu0
    %658 = vmatprep.mubr.bf16.mxu0 0
    %659 = vmatmul.mubr.bf16.gmra.mrb[0].mxu0 %v381
    %v660 = vpop.f32.mrb[0].mxu0
    %v661 = vadd.f32 %v103, %v660
    %v662 = vpop.f32.mrb[0].mxu0
    %v663 = vpop.f32.mrb[0].mxu0
    %v664 = vadd.f32 %v103, %v663
    %v665 = vpop.f32.mrb[0].mxu0
    %666 = vmatprep.mubr.bf16.mxu0 0
    %667 = vmatmul.mubr.bf16.gmra.mrb[0].mxu0 %v384
    %v668 = vpop.f32.mrb[0].mxu0
    %v669 = vadd.f32 %v103, %v668
    %v670 = vpop.f32.mrb[0].mxu0
    %v671 = vpop.f32.mrb[0].mxu0
    %v672 = vadd.f32 %v103, %v671
    %v673 = vpop.f32.mrb[0].mxu0
    %674 = vdwg.mxu0
    %v675 = vmax.f32 %v421, 0.0
    %v676 = vmax.f32 %v424, 0.0
    %v677 = vmax.f32 %v429, 0.0
    %v678 = vmax.f32 %v432, 0.0
    %v679 = vmax.f32 %v437, 0.0
    %v680 = vmax.f32 %v440, 0.0
    %v681 = vmax.f32 %v445, 0.0
    %v682 = vmax.f32 %v448, 0.0
    %v683 = vmax.f32 %v453, 0.0
    %v684 = vmax.f32 %v456, 0.0
    %v685 = vmax.f32 %v461, 0.0
    %v686 = vmax.f32 %v464, 0.0
    %v687 = vmax.f32 %v469, 0.0
    %v688 = vmax.f32 %v472, 0.0
    %v689 = vmax.f32 %v477, 0.0
    %v690 = vmax.f32 %v480, 0.0
    %v691 = vmax.f32 %v485, 0.0
    %v692 = vmax.f32 %v488, 0.0
    %v693 = vmax.f32 %v493, 0.0
    %v694 = vmax.f32 %v496, 0.0
    %v695 = vmax.f32 %v501, 0.0
    %v696 = vmax.f32 %v504, 0.0
    %v697 = vmax.f32 %v509, 0.0
    %v698 = vmax.f32 %v512, 0.0
    %v699 = vmax.f32 %v517, 0.0
    %v700 = vmax.f32 %v520, 0.0
    %v701 = vmax.f32 %v525, 0.0
    %v702 = vmax.f32 %v528, 0.0
    %v703 = vmax.f32 %v533, 0.0
    %v704 = vmax.f32 %v536, 0.0
    %v705 = vmax.f32 %v541, 0.0
    %v706 = vmax.f32 %v544, 0.0
    %v707 = vmax.f32 %v549, 0.0
    %v708 = vmax.f32 %v552, 0.0
    %v709 = vmax.f32 %v557, 0.0
    %v710 = vmax.f32 %v560, 0.0
    %v711 = vmax.f32 %v565, 0.0
    %v712 = vmax.f32 %v568, 0.0
    %v713 = vmax.f32 %v573, 0.0
    %v714 = vmax.f32 %v576, 0.0
    %v715 = vmax.f32 %v581, 0.0
    %v716 = vmax.f32 %v584, 0.0
    %v717 = vmax.f32 %v589, 0.0
    %v718 = vmax.f32 %v592, 0.0
    %v719 = vmax.f32 %v597, 0.0
    %v720 = vmax.f32 %v600, 0.0
    %v721 = vmax.f32 %v605, 0.0
    %v722 = vmax.f32 %v608, 0.0
    %v723 = vmax.f32 %v613, 0.0
    %v724 = vmax.f32 %v616, 0.0
    %v725 = vmax.f32 %v621, 0.0
    %v726 = vmax.f32 %v624, 0.0
    %v727 = vmax.f32 %v629, 0.0
    %v728 = vmax.f32 %v632, 0.0
    %v729 = vmax.f32 %v637, 0.0
    %v730 = vmax.f32 %v640, 0.0
    %v731 = vmax.f32 %v645, 0.0
    %v732 = vmax.f32 %v648, 0.0
    %v733 = vmax.f32 %v653, 0.0
    %v734 = vmax.f32 %v656, 0.0
    %v735 = vmax.f32 %v661, 0.0
    %v736 = vmax.f32 %v664, 0.0
    %v737 = vmax.f32 %v669, 0.0
    %v738 = vmax.f32 %v672, 0.0
    %v739 = vpack.c.bf16 %v676, %v675
    %v740 = vpack.c.bf16 %v678, %v677
    %v741 = vpack.c.bf16 %v680, %v679
    %v742 = vpack.c.bf16 %v682, %v681
    %v743 = vpack.c.bf16 %v684, %v683
    %v744 = vpack.c.bf16 %v686, %v685
    %v745 = vpack.c.bf16 %v688, %v687
    %v746 = vpack.c.bf16 %v690, %v689
    %v747 = vpack.c.bf16 %v692, %v691
    %v748 = vpack.c.bf16 %v694, %v693
    %v749 = vpack.c.bf16 %v696, %v695
    %v750 = vpack.c.bf16 %v698, %v697
    %v751 = vpack.c.bf16 %v700, %v699
    %v752 = vpack.c.bf16 %v702, %v701
    %v753 = vpack.c.bf16 %v704, %v703
    %v754 = vpack.c.bf16 %v706, %v705
    %v755 = vpack.c.bf16 %v708, %v707
    %v756 = vpack.c.bf16 %v710, %v709
    %v757 = vpack.c.bf16 %v712, %v711
    %v758 = vpack.c.bf16 %v714, %v713
    %v759 = vpack.c.bf16 %v716, %v715
    %v760 = vpack.c.bf16 %v718, %v717
    %v761 = vpack.c.bf16 %v720, %v719
    %v762 = vpack.c.bf16 %v722, %v721
    %v763 = vpack.c.bf16 %v724, %v723
    %v764 = vpack.c.bf16 %v726, %v725
    %v765 = vpack.c.bf16 %v728, %v727
    %v766 = vpack.c.bf16 %v730, %v729
    %v767 = vpack.c.bf16 %v732, %v731
    %v768 = vpack.c.bf16 %v734, %v733
    %v769 = vpack.c.bf16 %v736, %v735
    %v770 = vpack.c.bf16 %v738, %v737
    %v771 = vld [vmem:[%s3] sm:$0xf]
    %v772 = vld [vmem:[%s3 + $0x4] sm:$0xf]
    %v773 = vld [vmem:[%s3 + $0x8] sm:$0xf]
    %v774 = vld [vmem:[%s3 + $0xc] sm:$0xf]
    %v775 = vld [vmem:[%s3 + $0x10] sm:$0xf]
    %v776 = vld [vmem:[%s3 + $0x14] sm:$0xf]
    %v777 = vld [vmem:[%s3 + $0x18] sm:$0xf]
    %v778 = vld [vmem:[%s3 + $0x1c] sm:$0xf]
    %v779 = vld [vmem:[%s3 + $0x20] sm:$0xf]
    %v780 = vld [vmem:[%s3 + $0x24] sm:$0xf]
    %v781 = vld [vmem:[%s3 + $0x28] sm:$0xf]
    %v782 = vld [vmem:[%s3 + $0x2c] sm:$0xf]
    %v783 = vld [vmem:[%s3 + $0x30] sm:$0xf]
    %v784 = vld [vmem:[%s3 + $0x34] sm:$0xf]
    %v785 = vld [vmem:[%s3 + $0x38] sm:$0xf]
    %v786 = vld [vmem:[%s3 + $0x3c] sm:$0xf]
    %v787 = vld [vmem:[%s4] sm:$0x1]
    %v789 = vlaneseq
    %v790 = vshrl.u32 %v789, 7
    %v791 = vsub.s32 0, %v790
    %v792 = vrot.slane %v787, %v791
    %v810 = vunpack.c.l.b16 %v771
    %v811 = vunpack.c.l.b16 %v772
    %v812 = vunpack.c.l.b16 %v773
    %v813 = vunpack.c.l.b16 %v774
    %v814 = vunpack.c.l.b16 %v775
    %v815 = vunpack.c.l.b16 %v776
    %v816 = vunpack.c.l.b16 %v777
    %v817 = vunpack.c.l.b16 %v778
    %v818 = vunpack.c.l.b16 %v779
    %v819 = vunpack.c.l.b16 %v780
    %v820 = vunpack.c.l.b16 %v781
    %v821 = vunpack.c.l.b16 %v782
    %v822 = vunpack.c.l.b16 %v783
    %v823 = vunpack.c.l.b16 %v784
    %v824 = vunpack.c.l.b16 %v785
    %v825 = vunpack.c.l.b16 %v786
    %v826 = vpack.c.b16 %v811, %v810
    %v827 = vpack.c.b16 %v813, %v812
    %v828 = vpack.c.b16 %v815, %v814
    %v829 = vpack.c.b16 %v817, %v816
    %v830 = vpack.c.b16 %v819, %v818
    %v831 = vpack.c.b16 %v821, %v820
    %v832 = vpack.c.b16 %v823, %v822
    %v833 = vpack.c.b16 %v825, %v824
    %842 = vmatprep.subr.bf16.mxu0 0
    %843 = vmatpush1.bf16.msra.mxu0 %v826
    %844 = vmatprep.subr.bf16.mxu0 0
    %845 = vmatpush1.bf16.msra.mxu0 %v827
    %846 = vmatprep.subr.bf16.mxu0 0
    %847 = vmatpush1.bf16.msra.mxu0 %v828
    %848 = vmatprep.subr.bf16.mxu0 0
    %849 = vmatpush1.bf16.msra.mxu0 %v829
    %850 = vmatprep.subr.bf16.mxu0 0
    %851 = vmatpush1.bf16.msra.mxu0 %v830
    %852 = vmatprep.subr.bf16.mxu0 0
    %853 = vmatpush1.bf16.msra.mxu0 %v831
    %854 = vmatprep.subr.bf16.mxu0 0
    %855 = vmatpush1.bf16.msra.mxu0 %v832
    %856 = vmatprep.subr.bf16.mxu0 0
    %857 = vmatpush1.bf16.msra.mxu0 %v833
    %858 = vmatprep.subr.bf16.mxu0 0
    %859 = vmatpush1.bf16.msra.mxu0 0
    %860 = vmatprep.subr.bf16.mxu0 0
    %861 = vmatpush1.bf16.msra.mxu0 0
    %862 = vmatprep.subr.bf16.mxu0 0
    %863 = vmatpush1.bf16.msra.mxu0 0
    %864 = vmatprep.subr.bf16.mxu0 0
    %865 = vmatpush1.bf16.msra.mxu0 0
    %866 = vmatprep.subr.bf16.mxu0 0
    %867 = vmatpush1.bf16.msra.mxu0 0
    %868 = vmatprep.subr.bf16.mxu0 0
    %869 = vmatpush1.bf16.msra.mxu0 0
    %870 = vmatprep.subr.bf16.mxu0 0
    %871 = vmatpush1.bf16.msra.mxu0 0
    %872 = vmatprep.subr.bf16.mxu0 0
    %873 = vmatpush1.bf16.msra.mxu0 0
    %874 = vmatprep.mubr.bf16.mxu0 0
    %875 = vmatmul.mubr.bf16.gmra.mrb[0].mxu0 %v739
    %v876 = vpop.f32.mrb[0].mxu0
    %v877 = vadd.f32 %v792, %v876
    %v878 = vpop.f32.mrb[0].mxu0
    %v879 = vpop.f32.mrb[0].mxu0
    %v880 = vadd.f32 %v792, %v879
    %v881 = vpop.f32.mrb[0].mxu0
    %882 = vmatprep.mubr.bf16.mxu0 0
    %883 = vmatmul.mubr.bf16.gmra.mrb[0].mxu0 %v740
    %v884 = vpop.f32.mrb[0].mxu0
    %v885 = vadd.f32 %v792, %v884
    %v886 = vpop.f32.mrb[0].mxu0
    %v887 = vpop.f32.mrb[0].mxu0
    %v888 = vadd.f32 %v792, %v887
    %v889 = vpop.f32.mrb[0].mxu0
    %890 = vmatprep.mubr.bf16.mxu0 0
    %891 = vmatmul.mubr.bf16.gmra.mrb[0].mxu0 %v741
    %v892 = vpop.f32.mrb[0].mxu0
    %v893 = vadd.f32 %v792, %v892
    %v894 = vpop.f32.mrb[0].mxu0
    %v895 = vpop.f32.mrb[0].mxu0
    %v896 = vadd.f32 %v792, %v895
    %v897 = vpop.f32.mrb[0].mxu0
    %898 = vmatprep.mubr.bf16.mxu0 0
    %899 = vmatmul.mubr.bf16.gmra.mrb[0].mxu0 %v742
    %v900 = vpop.f32.mrb[0].mxu0
    %v901 = vadd.f32 %v792, %v900
    %v902 = vpop.f32.mrb[0].mxu0
    %v903 = vpop.f32.mrb[0].mxu0
    %v904 = vadd.f32 %v792, %v903
    %v905 = vpop.f32.mrb[0].mxu0
    %906 = vmatprep.mubr.bf16.mxu0 0
    %907 = vmatmul.mubr.bf16.gmra.mrb[0].mxu0 %v743
    %v908 = vpop.f32.mrb[0].mxu0
    %v909 = vadd.f32 %v792, %v908
    %v910 = vpop.f32.mrb[0].mxu0
    %v911 = vpop.f32.mrb[0].mxu0
    %v912 = vadd.f32 %v792, %v911
    %v913 = vpop.f32.mrb[0].mxu0
    %914 = vmatprep.mubr.bf16.mxu0 0
    %915 = vmatmul.mubr.bf16.gmra.mrb[0].mxu0 %v744
    %v916 = vpop.f32.mrb[0].mxu0
    %v917 = vadd.f32 %v792, %v916
    %v918 = vpop.f32.mrb[0].mxu0
    %v919 = vpop.f32.mrb[0].mxu0
    %v920 = vadd.f32 %v792, %v919
    %v921 = vpop.f32.mrb[0].mxu0
    %922 = vmatprep.mubr.bf16.mxu0 0
    %923 = vmatmul.mubr.bf16.gmra.mrb[0].mxu0 %v745
    %v924 = vpop.f32.mrb[0].mxu0
    %v925 = vadd.f32 %v792, %v924
    %v926 = vpop.f32.mrb[0].mxu0
    %v927 = vpop.f32.mrb[0].mxu0
    %v928 = vadd.f32 %v792, %v927
    %v929 = vpop.f32.mrb[0].mxu0
    %930 = vmatprep.mubr.bf16.mxu0 0
    %931 = vmatmul.mubr.bf16.gmra.mrb[0].mxu0 %v746
    %v932 = vpop.f32.mrb[0].mxu0
    %v933 = vadd.f32 %v792, %v932
    %v934 = vpop.f32.mrb[0].mxu0
    %v935 = vpop.f32.mrb[0].mxu0
    %v936 = vadd.f32 %v792, %v935
    %v937 = vpop.f32.mrb[0].mxu0
    %938 = vmatprep.mubr.bf16.mxu0 0
    %939 = vmatmul.mubr.bf16.gmra.mrb[0].mxu0 %v747
    %v940 = vpop.f32.mrb[0].mxu0
    %v941 = vadd.f32 %v792, %v940
    %v942 = vpop.f32.mrb[0].mxu0
    %v943 = vpop.f32.mrb[0].mxu0
    %v944 = vadd.f32 %v792, %v943
    %v945 = vpop.f32.mrb[0].mxu0
    %946 = vmatprep.mubr.bf16.mxu0 0
    %947 = vmatmul.mubr.bf16.gmra.mrb[0].mxu0 %v748
    %v948 = vpop.f32.mrb[0].mxu0
    %v949 = vadd.f32 %v792, %v948
    %v950 = vpop.f32.mrb[0].mxu0
    %v951 = vpop.f32.mrb[0].mxu0
    %v952 = vadd.f32 %v792, %v951
    %v953 = vpop.f32.mrb[0].mxu0
    %954 = vmatprep.mubr.bf16.mxu0 0
    %955 = vmatmul.mubr.bf16.gmra.mrb[0].mxu0 %v749
    %v956 = vpop.f32.mrb[0].mxu0
    %v957 = vadd.f32 %v792, %v956
    %v958 = vpop.f32.mrb[0].mxu0
    %v959 = vpop.f32.mrb[0].mxu0
    %v960 = vadd.f32 %v792, %v959
    %v961 = vpop.f32.mrb[0].mxu0
    %962 = vmatprep.mubr.bf16.mxu0 0
    %963 = vmatmul.mubr.bf16.gmra.mrb[0].mxu0 %v750
    %v964 = vpop.f32.mrb[0].mxu0
    %v965 = vadd.f32 %v792, %v964
    %v966 = vpop.f32.mrb[0].mxu0
    %v967 = vpop.f32.mrb[0].mxu0
    %v968 = vadd.f32 %v792, %v967
    %v969 = vpop.f32.mrb[0].mxu0
    %970 = vmatprep.mubr.bf16.mxu0 0
    %971 = vmatmul.mubr.bf16.gmra.mrb[0].mxu0 %v751
    %v972 = vpop.f32.mrb[0].mxu0
    %v973 = vadd.f32 %v792, %v972
    %v974 = vpop.f32.mrb[0].mxu0
    %v975 = vpop.f32.mrb[0].mxu0
    %v976 = vadd.f32 %v792, %v975
    %v977 = vpop.f32.mrb[0].mxu0
    %978 = vmatprep.mubr.bf16.mxu0 0
    %979 = vmatmul.mubr.bf16.gmra.mrb[0].mxu0 %v752
    %v980 = vpop.f32.mrb[0].mxu0
    %v981 = vadd.f32 %v792, %v980
    %v982 = vpop.f32.mrb[0].mxu0
    %v983 = vpop.f32.mrb[0].mxu0
    %v984 = vadd.f32 %v792, %v983
    %v985 = vpop.f32.mrb[0].mxu0
    %986 = vmatprep.mubr.bf16.mxu0 0
    %987 = vmatmul.mubr.bf16.gmra.mrb[0].mxu0 %v753
    %v988 = vpop.f32.mrb[0].mxu0
    %v989 = vadd.f32 %v792, %v988
    %v990 = vpop.f32.mrb[0].mxu0
    %v991 = vpop.f32.mrb[0].mxu0
    %v992 = vadd.f32 %v792, %v991
    %v993 = vpop.f32.mrb[0].mxu0
    %994 = vmatprep.mubr.bf16.mxu0 0
    %995 = vmatmul.mubr.bf16.gmra.mrb[0].mxu0 %v754
    %v996 = vpop.f32.mrb[0].mxu0
    %v997 = vadd.f32 %v792, %v996
    %v998 = vpop.f32.mrb[0].mxu0
    %v999 = vpop.f32.mrb[0].mxu0
    %v1000 = vadd.f32 %v792, %v999
    %v1001 = vpop.f32.mrb[0].mxu0
    %1002 = vmatprep.mubr.bf16.mxu0 0
    %1003 = vmatmul.mubr.bf16.gmra.mrb[0].mxu0 %v755
    %v1004 = vpop.f32.mrb[0].mxu0
    %v1005 = vadd.f32 %v792, %v1004
    %v1006 = vpop.f32.mrb[0].mxu0
    %v1007 = vpop.f32.mrb[0].mxu0
    %v1008 = vadd.f32 %v792, %v1007
    %v1009 = vpop.f32.mrb[0].mxu0
    %1010 = vmatprep.mubr.bf16.mxu0 0
    %1011 = vmatmul.mubr.bf16.gmra.mrb[0].mxu0 %v756
    %v1012 = vpop.f32.mrb[0].mxu0
    %v1013 = vadd.f32 %v792, %v1012
    %v1014 = vpop.f32.mrb[0].mxu0
    %v1015 = vpop.f32.mrb[0].mxu0
    %v1016 = vadd.f32 %v792, %v1015
    %v1017 = vpop.f32.mrb[0].mxu0
    %1018 = vmatprep.mubr.bf16.mxu0 0
    %1019 = vmatmul.mubr.bf16.gmra.mrb[0].mxu0 %v757
    %v1020 = vpop.f32.mrb[0].mxu0
    %v1021 = vadd.f32 %v792, %v1020
    %v1022 = vpop.f32.mrb[0].mxu0
    %v1023 = vpop.f32.mrb[0].mxu0
    %v1024 = vadd.f32 %v792, %v1023
    %v1025 = vpop.f32.mrb[0].mxu0
    %1026 = vmatprep.mubr.bf16.mxu0 0
    %1027 = vmatmul.mubr.bf16.gmra.mrb[0].mxu0 %v758
    %v1028 = vpop.f32.mrb[0].mxu0
    %v1029 = vadd.f32 %v792, %v1028
    %v1030 = vpop.f32.mrb[0].mxu0
    %v1031 = vpop.f32.mrb[0].mxu0
    %v1032 = vadd.f32 %v792, %v1031
    %v1033 = vpop.f32.mrb[0].mxu0
    %1034 = vmatprep.mubr.bf16.mxu0 0
    %1035 = vmatmul.mubr.bf16.gmra.mrb[0].mxu0 %v759
    %v1036 = vpop.f32.mrb[0].mxu0
    %v1037 = vadd.f32 %v792, %v1036
    %v1038 = vpop.f32.mrb[0].mxu0
    %v1039 = vpop.f32.mrb[0].mxu0
    %v1040 = vadd.f32 %v792, %v1039
    %v1041 = vpop.f32.mrb[0].mxu0
    %1042 = vmatprep.mubr.bf16.mxu0 0
    %1043 = vmatmul.mubr.bf16.gmra.mrb[0].mxu0 %v760
    %v1044 = vpop.f32.mrb[0].mxu0
    %v1045 = vadd.f32 %v792, %v1044
    %v1046 = vpop.f32.mrb[0].mxu0
    %v1047 = vpop.f32.mrb[0].mxu0
    %v1048 = vadd.f32 %v792, %v1047
    %v1049 = vpop.f32.mrb[0].mxu0
    %1050 = vmatprep.mubr.bf16.mxu0 0
    %1051 = vmatmul.mubr.bf16.gmra.mrb[0].mxu0 %v761
    %v1052 = vpop.f32.mrb[0].mxu0
    %v1053 = vadd.f32 %v792, %v1052
    %v1054 = vpop.f32.mrb[0].mxu0
    %v1055 = vpop.f32.mrb[0].mxu0
    %v1056 = vadd.f32 %v792, %v1055
    %v1057 = vpop.f32.mrb[0].mxu0
    %1058 = vmatprep.mubr.bf16.mxu0 0
    %1059 = vmatmul.mubr.bf16.gmra.mrb[0].mxu0 %v762
    %v1060 = vpop.f32.mrb[0].mxu0
    %v1061 = vadd.f32 %v792, %v1060
    %v1062 = vpop.f32.mrb[0].mxu0
    %v1063 = vpop.f32.mrb[0].mxu0
    %v1064 = vadd.f32 %v792, %v1063
    %v1065 = vpop.f32.mrb[0].mxu0
    %1066 = vmatprep.mubr.bf16.mxu0 0
    %1067 = vmatmul.mubr.bf16.gmra.mrb[0].mxu0 %v763
    %v1068 = vpop.f32.mrb[0].mxu0
    %v1069 = vadd.f32 %v792, %v1068
    %v1070 = vpop.f32.mrb[0].mxu0
    %v1071 = vpop.f32.mrb[0].mxu0
    %v1072 = vadd.f32 %v792, %v1071
    %v1073 = vpop.f32.mrb[0].mxu0
    %1074 = vmatprep.mubr.bf16.mxu0 0
    %1075 = vmatmul.mubr.bf16.gmra.mrb[0].mxu0 %v764
    %v1076 = vpop.f32.mrb[0].mxu0
    %v1077 = vadd.f32 %v792, %v1076
    %v1078 = vpop.f32.mrb[0].mxu0
    %v1079 = vpop.f32.mrb[0].mxu0
    %v1080 = vadd.f32 %v792, %v1079
    %v1081 = vpop.f32.mrb[0].mxu0
    %1082 = vmatprep.mubr.bf16.mxu0 0
    %1083 = vmatmul.mubr.bf16.gmra.mrb[0].mxu0 %v765
    %v1084 = vpop.f32.mrb[0].mxu0
    %v1085 = vadd.f32 %v792, %v1084
    %v1086 = vpop.f32.mrb[0].mxu0
    %v1087 = vpop.f32.mrb[0].mxu0
    %v1088 = vadd.f32 %v792, %v1087
    %v1089 = vpop.f32.mrb[0].mxu0
    %1090 = vmatprep.mubr.bf16.mxu0 0
    %1091 = vmatmul.mubr.bf16.gmra.mrb[0].mxu0 %v766
    %v1092 = vpop.f32.mrb[0].mxu0
    %v1093 = vadd.f32 %v792, %v1092
    %v1094 = vpop.f32.mrb[0].mxu0
    %v1095 = vpop.f32.mrb[0].mxu0
    %v1096 = vadd.f32 %v792, %v1095
    %v1097 = vpop.f32.mrb[0].mxu0
    %1098 = vmatprep.mubr.bf16.mxu0 0
    %1099 = vmatmul.mubr.bf16.gmra.mrb[0].mxu0 %v767
    %v1100 = vpop.f32.mrb[0].mxu0
    %v1101 = vadd.f32 %v792, %v1100
    %v1102 = vpop.f32.mrb[0].mxu0
    %v1103 = vpop.f32.mrb[0].mxu0
    %v1104 = vadd.f32 %v792, %v1103
    %v1105 = vpop.f32.mrb[0].mxu0
    %1106 = vmatprep.mubr.bf16.mxu0 0
    %1107 = vmatmul.mubr.bf16.gmra.mrb[0].mxu0 %v768
    %v1108 = vpop.f32.mrb[0].mxu0
    %v1109 = vadd.f32 %v792, %v1108
    %v1110 = vpop.f32.mrb[0].mxu0
    %v1111 = vpop.f32.mrb[0].mxu0
    %v1112 = vadd.f32 %v792, %v1111
    %v1113 = vpop.f32.mrb[0].mxu0
    %1114 = vmatprep.mubr.bf16.mxu0 0
    %1115 = vmatmul.mubr.bf16.gmra.mrb[0].mxu0 %v769
    %v1116 = vpop.f32.mrb[0].mxu0
    %v1117 = vadd.f32 %v792, %v1116
    %v1118 = vpop.f32.mrb[0].mxu0
    %v1119 = vpop.f32.mrb[0].mxu0
    %v1120 = vadd.f32 %v792, %v1119
    %v1121 = vpop.f32.mrb[0].mxu0
    %1122 = vmatprep.mubr.bf16.mxu0 0
    %1123 = vmatmul.mubr.bf16.gmra.mrb[0].mxu0 %v770
    %v1124 = vpop.f32.mrb[0].mxu0
    %v1125 = vadd.f32 %v792, %v1124
    %v1126 = vpop.f32.mrb[0].mxu0
    %v1127 = vpop.f32.mrb[0].mxu0
    %v1128 = vadd.f32 %v792, %v1127
    %v1129 = vpop.f32.mrb[0].mxu0
    %1130 = vdwg.mxu0
    %vm1131 = vcmask 64512
    %v1132 = vsel %vm1131, %v877, -inf
    %1133 = vmax.xlane.f32.xlu0 %v1132
    %v1134 = vpop.xlane.xlu0 %1133
    %v1135 = vsel %vm1131, %v880, -inf
    %1136 = vmax.xlane.f32.xlu0 %v1135
    %v1137 = vpop.xlane.xlu0 %1136
    %v1138 = vsel %vm1131, %v885, -inf
    %1139 = vmax.xlane.f32.xlu0 %v1138
    %v1140 = vpop.xlane.xlu0 %1139
    %v1141 = vsel %vm1131, %v888, -inf
    %1142 = vmax.xlane.f32.xlu0 %v1141
    %v1143 = vpop.xlane.xlu0 %1142
    %v1144 = vsel %vm1131, %v893, -inf
    %1145 = vmax.xlane.f32.xlu0 %v1144
    %v1146 = vpop.xlane.xlu0 %1145
    %v1147 = vsel %vm1131, %v896, -inf
    %1148 = vmax.xlane.f32.xlu0 %v1147
    %v1149 = vpop.xlane.xlu0 %1148
    %v1150 = vsel %vm1131, %v901, -inf
    %1151 = vmax.xlane.f32.xlu0 %v1150
    %v1152 = vpop.xlane.xlu0 %1151
    %v1153 = vsel %vm1131, %v904, -inf
    %1154 = vmax.xlane.f32.xlu0 %v1153
    %v1155 = vpop.xlane.xlu0 %1154
    %v1156 = vsel %vm1131, %v909, -inf
    %1157 = vmax.xlane.f32.xlu0 %v1156
    %v1158 = vpop.xlane.xlu0 %1157
    %v1159 = vsel %vm1131, %v912, -inf
    %1160 = vmax.xlane.f32.xlu0 %v1159
    %v1161 = vpop.xlane.xlu0 %1160
    %v1162 = vsel %vm1131, %v917, -inf
    %1163 = vmax.xlane.f32.xlu0 %v1162
    %v1164 = vpop.xlane.xlu0 %1163
    %v1165 = vsel %vm1131, %v920, -inf
    %1166 = vmax.xlane.f32.xlu0 %v1165
    %v1167 = vpop.xlane.xlu0 %1166
    %v1168 = vsel %vm1131, %v925, -inf
    %1169 = vmax.xlane.f32.xlu0 %v1168
    %v1170 = vpop.xlane.xlu0 %1169
    %v1171 = vsel %vm1131, %v928, -inf
    %1172 = vmax.xlane.f32.xlu0 %v1171
    %v1173 = vpop.xlane.xlu0 %1172
    %v1174 = vsel %vm1131, %v933, -inf
    %1175 = vmax.xlane.f32.xlu0 %v1174
    %v1176 = vpop.xlane.xlu0 %1175
    %v1177 = vsel %vm1131, %v936, -inf
    %1178 = vmax.xlane.f32.xlu0 %v1177
    %v1179 = vpop.xlane.xlu0 %1178
    %v1180 = vsel %vm1131, %v941, -inf
    %1181 = vmax.xlane.f32.xlu0 %v1180
    %v1182 = vpop.xlane.xlu0 %1181
    %v1183 = vsel %vm1131, %v944, -inf
    %1184 = vmax.xlane.f32.xlu0 %v1183
    %v1185 = vpop.xlane.xlu0 %1184
    %v1186 = vsel %vm1131, %v949, -inf
    %1187 = vmax.xlane.f32.xlu0 %v1186
    %v1188 = vpop.xlane.xlu0 %1187
    %v1189 = vsel %vm1131, %v952, -inf
    %1190 = vmax.xlane.f32.xlu0 %v1189
    %v1191 = vpop.xlane.xlu0 %1190
    %v1192 = vsel %vm1131, %v957, -inf
    %1193 = vmax.xlane.f32.xlu0 %v1192
    %v1194 = vpop.xlane.xlu0 %1193
    %v1195 = vsel %vm1131, %v960, -inf
    %1196 = vmax.xlane.f32.xlu0 %v1195
    %v1197 = vpop.xlane.xlu0 %1196
    %v1198 = vsel %vm1131, %v965, -inf
    %1199 = vmax.xlane.f32.xlu0 %v1198
    %v1200 = vpop.xlane.xlu0 %1199
    %v1201 = vsel %vm1131, %v968, -inf
    %1202 = vmax.xlane.f32.xlu0 %v1201
    %v1203 = vpop.xlane.xlu0 %1202
    %v1204 = vsel %vm1131, %v973, -inf
    %1205 = vmax.xlane.f32.xlu0 %v1204
    %v1206 = vpop.xlane.xlu0 %1205
    %v1207 = vsel %vm1131, %v976, -inf
    %1208 = vmax.xlane.f32.xlu0 %v1207
    %v1209 = vpop.xlane.xlu0 %1208
    %v1210 = vsel %vm1131, %v981, -inf
    %1211 = vmax.xlane.f32.xlu0 %v1210
    %v1212 = vpop.xlane.xlu0 %1211
    %v1213 = vsel %vm1131, %v984, -inf
    %1214 = vmax.xlane.f32.xlu0 %v1213
    %v1215 = vpop.xlane.xlu0 %1214
    %v1216 = vsel %vm1131, %v989, -inf
    %1217 = vmax.xlane.f32.xlu0 %v1216
    %v1218 = vpop.xlane.xlu0 %1217
    %v1219 = vsel %vm1131, %v992, -inf
    %1220 = vmax.xlane.f32.xlu0 %v1219
    %v1221 = vpop.xlane.xlu0 %1220
    %v1222 = vsel %vm1131, %v997, -inf
    %1223 = vmax.xlane.f32.xlu0 %v1222
    %v1224 = vpop.xlane.xlu0 %1223
    %v1225 = vsel %vm1131, %v1000, -inf
    %1226 = vmax.xlane.f32.xlu0 %v1225
    %v1227 = vpop.xlane.xlu0 %1226
    %v1228 = vsel %vm1131, %v1005, -inf
    %1229 = vmax.xlane.f32.xlu0 %v1228
    %v1230 = vpop.xlane.xlu0 %1229
    %v1231 = vsel %vm1131, %v1008, -inf
    %1232 = vmax.xlane.f32.xlu0 %v1231
    %v1233 = vpop.xlane.xlu0 %1232
    %v1234 = vsel %vm1131, %v1013, -inf
    %1235 = vmax.xlane.f32.xlu0 %v1234
    %v1236 = vpop.xlane.xlu0 %1235
    %v1237 = vsel %vm1131, %v1016, -inf
    %1238 = vmax.xlane.f32.xlu0 %v1237
    %v1239 = vpop.xlane.xlu0 %1238
    %v1240 = vsel %vm1131, %v1021, -inf
    %1241 = vmax.xlane.f32.xlu0 %v1240
    %v1242 = vpop.xlane.xlu0 %1241
    %v1243 = vsel %vm1131, %v1024, -inf
    %1244 = vmax.xlane.f32.xlu0 %v1243
    %v1245 = vpop.xlane.xlu0 %1244
    %v1246 = vsel %vm1131, %v1029, -inf
    %1247 = vmax.xlane.f32.xlu0 %v1246
    %v1248 = vpop.xlane.xlu0 %1247
    %v1249 = vsel %vm1131, %v1032, -inf
    %1250 = vmax.xlane.f32.xlu0 %v1249
    %v1251 = vpop.xlane.xlu0 %1250
    %v1252 = vsel %vm1131, %v1037, -inf
    %1253 = vmax.xlane.f32.xlu0 %v1252
    %v1254 = vpop.xlane.xlu0 %1253
    %v1255 = vsel %vm1131, %v1040, -inf
    %1256 = vmax.xlane.f32.xlu0 %v1255
    %v1257 = vpop.xlane.xlu0 %1256
    %v1258 = vsel %vm1131, %v1045, -inf
    %1259 = vmax.xlane.f32.xlu0 %v1258
    %v1260 = vpop.xlane.xlu0 %1259
    %v1261 = vsel %vm1131, %v1048, -inf
    %1262 = vmax.xlane.f32.xlu0 %v1261
    %v1263 = vpop.xlane.xlu0 %1262
    %v1264 = vsel %vm1131, %v1053, -inf
    %1265 = vmax.xlane.f32.xlu0 %v1264
    %v1266 = vpop.xlane.xlu0 %1265
    %v1267 = vsel %vm1131, %v1056, -inf
    %1268 = vmax.xlane.f32.xlu0 %v1267
    %v1269 = vpop.xlane.xlu0 %1268
    %v1270 = vsel %vm1131, %v1061, -inf
    %1271 = vmax.xlane.f32.xlu0 %v1270
    %v1272 = vpop.xlane.xlu0 %1271
    %v1273 = vsel %vm1131, %v1064, -inf
    %1274 = vmax.xlane.f32.xlu0 %v1273
    %v1275 = vpop.xlane.xlu0 %1274
    %v1276 = vsel %vm1131, %v1069, -inf
    %1277 = vmax.xlane.f32.xlu0 %v1276
    %v1278 = vpop.xlane.xlu0 %1277
    %v1279 = vsel %vm1131, %v1072, -inf
    %1280 = vmax.xlane.f32.xlu0 %v1279
    %v1281 = vpop.xlane.xlu0 %1280
    %v1282 = vsel %vm1131, %v1077, -inf
    %1283 = vmax.xlane.f32.xlu0 %v1282
    %v1284 = vpop.xlane.xlu0 %1283
    %v1285 = vsel %vm1131, %v1080, -inf
    %1286 = vmax.xlane.f32.xlu0 %v1285
    %v1287 = vpop.xlane.xlu0 %1286
    %v1288 = vsel %vm1131, %v1085, -inf
    %1289 = vmax.xlane.f32.xlu0 %v1288
    %v1290 = vpop.xlane.xlu0 %1289
    %v1291 = vsel %vm1131, %v1088, -inf
    %1292 = vmax.xlane.f32.xlu0 %v1291
    %v1293 = vpop.xlane.xlu0 %1292
    %v1294 = vsel %vm1131, %v1093, -inf
    %1295 = vmax.xlane.f32.xlu0 %v1294
    %v1296 = vpop.xlane.xlu0 %1295
    %v1297 = vsel %vm1131, %v1096, -inf
    %1298 = vmax.xlane.f32.xlu0 %v1297
    %v1299 = vpop.xlane.xlu0 %1298
    %v1300 = vsel %vm1131, %v1101, -inf
    %1301 = vmax.xlane.f32.xlu0 %v1300
    %v1302 = vpop.xlane.xlu0 %1301
    %v1303 = vsel %vm1131, %v1104, -inf
    %1304 = vmax.xlane.f32.xlu0 %v1303
    %v1305 = vpop.xlane.xlu0 %1304
    %v1306 = vsel %vm1131, %v1109, -inf
    %1307 = vmax.xlane.f32.xlu0 %v1306
    %v1308 = vpop.xlane.xlu0 %1307
    %v1309 = vsel %vm1131, %v1112, -inf
    %1310 = vmax.xlane.f32.xlu0 %v1309
    %v1311 = vpop.xlane.xlu0 %1310
    %v1312 = vsel %vm1131, %v1117, -inf
    %1313 = vmax.xlane.f32.xlu0 %v1312
    %v1314 = vpop.xlane.xlu0 %1313
    %v1315 = vsel %vm1131, %v1120, -inf
    %1316 = vmax.xlane.f32.xlu0 %v1315
    %v1317 = vpop.xlane.xlu0 %1316
    %v1318 = vsel %vm1131, %v1125, -inf
    %1319 = vmax.xlane.f32.xlu0 %v1318
    %v1320 = vpop.xlane.xlu0 %1319
    %v1321 = vsel %vm1131, %v1128, -inf
    %1322 = vmax.xlane.f32.xlu0 %v1321
    %v1323 = vpop.xlane.xlu0 %1322
    %v1324 = vsub.f32 %v877, %v1134
    %v1325 = vsub.f32 %v880, %v1137
    %v1326 = vsub.f32 %v885, %v1140
    %v1327 = vsub.f32 %v888, %v1143
    %v1328 = vsub.f32 %v893, %v1146
    %v1329 = vsub.f32 %v896, %v1149
    %v1330 = vsub.f32 %v901, %v1152
    %v1331 = vsub.f32 %v904, %v1155
    %v1332 = vsub.f32 %v909, %v1158
    %v1333 = vsub.f32 %v912, %v1161
    %v1334 = vsub.f32 %v917, %v1164
    %v1335 = vsub.f32 %v920, %v1167
    %v1336 = vsub.f32 %v925, %v1170
    %v1337 = vsub.f32 %v928, %v1173
    %v1338 = vsub.f32 %v933, %v1176
    %v1339 = vsub.f32 %v936, %v1179
    %v1340 = vsub.f32 %v941, %v1182
    %v1341 = vsub.f32 %v944, %v1185
    %v1342 = vsub.f32 %v949, %v1188
    %v1343 = vsub.f32 %v952, %v1191
    %v1344 = vsub.f32 %v957, %v1194
    %v1345 = vsub.f32 %v960, %v1197
    %v1346 = vsub.f32 %v965, %v1200
    %v1347 = vsub.f32 %v968, %v1203
    %v1348 = vsub.f32 %v973, %v1206
    %v1349 = vsub.f32 %v976, %v1209
    %v1350 = vsub.f32 %v981, %v1212
    %v1351 = vsub.f32 %v984, %v1215
    %v1352 = vsub.f32 %v989, %v1218
    %v1353 = vsub.f32 %v992, %v1221
    %v1354 = vsub.f32 %v997, %v1224
    %v1355 = vsub.f32 %v1000, %v1227
    %v1356 = vsub.f32 %v1005, %v1230
    %v1357 = vsub.f32 %v1008, %v1233
    %v1358 = vsub.f32 %v1013, %v1236
    %v1359 = vsub.f32 %v1016, %v1239
    %v1360 = vsub.f32 %v1021, %v1242
    %v1361 = vsub.f32 %v1024, %v1245
    %v1362 = vsub.f32 %v1029, %v1248
    %v1363 = vsub.f32 %v1032, %v1251
    %v1364 = vsub.f32 %v1037, %v1254
    %v1365 = vsub.f32 %v1040, %v1257
    %v1366 = vsub.f32 %v1045, %v1260
    %v1367 = vsub.f32 %v1048, %v1263
    %v1368 = vsub.f32 %v1053, %v1266
    %v1369 = vsub.f32 %v1056, %v1269
    %v1370 = vsub.f32 %v1061, %v1272
    %v1371 = vsub.f32 %v1064, %v1275
    %v1372 = vsub.f32 %v1069, %v1278
    %v1373 = vsub.f32 %v1072, %v1281
    %v1374 = vsub.f32 %v1077, %v1284
    %v1375 = vsub.f32 %v1080, %v1287
    %v1376 = vsub.f32 %v1085, %v1290
    %v1377 = vsub.f32 %v1088, %v1293
    %v1378 = vsub.f32 %v1093, %v1296
    %v1379 = vsub.f32 %v1096, %v1299
    %v1380 = vsub.f32 %v1101, %v1302
    %v1381 = vsub.f32 %v1104, %v1305
    %v1382 = vsub.f32 %v1109, %v1308
    %v1383 = vsub.f32 %v1112, %v1311
    %v1384 = vsub.f32 %v1117, %v1314
    %v1385 = vsub.f32 %v1120, %v1317
    %v1386 = vsub.f32 %v1125, %v1320
    %v1387 = vsub.f32 %v1128, %v1323
    %v1388 = vmul.f32 %v1324, 1.442695
    %v1389 = vpow.pop %v1388
    %v1390 = vmul.f32 %v1325, 1.442695
    %v1391 = vpow.pop %v1390
    %v1392 = vmul.f32 %v1326, 1.442695
    %v1393 = vpow.pop %v1392
    %v1394 = vmul.f32 %v1327, 1.442695
    %v1395 = vpow.pop %v1394
    %v1396 = vmul.f32 %v1328, 1.442695
    %v1397 = vpow.pop %v1396
    %v1398 = vmul.f32 %v1329, 1.442695
    %v1399 = vpow.pop %v1398
    %v1400 = vmul.f32 %v1330, 1.442695
    %v1401 = vpow.pop %v1400
    %v1402 = vmul.f32 %v1331, 1.442695
    %v1403 = vpow.pop %v1402
    %v1404 = vmul.f32 %v1332, 1.442695
    %v1405 = vpow.pop %v1404
    %v1406 = vmul.f32 %v1333, 1.442695
    %v1407 = vpow.pop %v1406
    %v1408 = vmul.f32 %v1334, 1.442695
    %v1409 = vpow.pop %v1408
    %v1410 = vmul.f32 %v1335, 1.442695
    %v1411 = vpow.pop %v1410
    %v1412 = vmul.f32 %v1336, 1.442695
    %v1413 = vpow.pop %v1412
    %v1414 = vmul.f32 %v1337, 1.442695
    %v1415 = vpow.pop %v1414
    %v1416 = vmul.f32 %v1338, 1.442695
    %v1417 = vpow.pop %v1416
    %v1418 = vmul.f32 %v1339, 1.442695
    %v1419 = vpow.pop %v1418
    %v1420 = vmul.f32 %v1340, 1.442695
    %v1421 = vpow.pop %v1420
    %v1422 = vmul.f32 %v1341, 1.442695
    %v1423 = vpow.pop %v1422
    %v1424 = vmul.f32 %v1342, 1.442695
    %v1425 = vpow.pop %v1424
    %v1426 = vmul.f32 %v1343, 1.442695
    %v1427 = vpow.pop %v1426
    %v1428 = vmul.f32 %v1344, 1.442695
    %v1429 = vpow.pop %v1428
    %v1430 = vmul.f32 %v1345, 1.442695
    %v1431 = vpow.pop %v1430
    %v1432 = vmul.f32 %v1346, 1.442695
    %v1433 = vpow.pop %v1432
    %v1434 = vmul.f32 %v1347, 1.442695
    %v1435 = vpow.pop %v1434
    %v1436 = vmul.f32 %v1348, 1.442695
    %v1437 = vpow.pop %v1436
    %v1438 = vmul.f32 %v1349, 1.442695
    %v1439 = vpow.pop %v1438
    %v1440 = vmul.f32 %v1350, 1.442695
    %v1441 = vpow.pop %v1440
    %v1442 = vmul.f32 %v1351, 1.442695
    %v1443 = vpow.pop %v1442
    %v1444 = vmul.f32 %v1352, 1.442695
    %v1445 = vpow.pop %v1444
    %v1446 = vmul.f32 %v1353, 1.442695
    %v1447 = vpow.pop %v1446
    %v1448 = vmul.f32 %v1354, 1.442695
    %v1449 = vpow.pop %v1448
    %v1450 = vmul.f32 %v1355, 1.442695
    %v1451 = vpow.pop %v1450
    %v1452 = vmul.f32 %v1356, 1.442695
    %v1453 = vpow.pop %v1452
    %v1454 = vmul.f32 %v1357, 1.442695
    %v1455 = vpow.pop %v1454
    %v1456 = vmul.f32 %v1358, 1.442695
    %v1457 = vpow.pop %v1456
    %v1458 = vmul.f32 %v1359, 1.442695
    %v1459 = vpow.pop %v1458
    %v1460 = vmul.f32 %v1360, 1.442695
    %v1461 = vpow.pop %v1460
    %v1462 = vmul.f32 %v1361, 1.442695
    %v1463 = vpow.pop %v1462
    %v1464 = vmul.f32 %v1362, 1.442695
    %v1465 = vpow.pop %v1464
    %v1466 = vmul.f32 %v1363, 1.442695
    %v1467 = vpow.pop %v1466
    %v1468 = vmul.f32 %v1364, 1.442695
    %v1469 = vpow.pop %v1468
    %v1470 = vmul.f32 %v1365, 1.442695
    %v1471 = vpow.pop %v1470
    %v1472 = vmul.f32 %v1366, 1.442695
    %v1473 = vpow.pop %v1472
    %v1474 = vmul.f32 %v1367, 1.442695
    %v1475 = vpow.pop %v1474
    %v1476 = vmul.f32 %v1368, 1.442695
    %v1477 = vpow.pop %v1476
    %v1478 = vmul.f32 %v1369, 1.442695
    %v1479 = vpow.pop %v1478
    %v1480 = vmul.f32 %v1370, 1.442695
    %v1481 = vpow.pop %v1480
    %v1482 = vmul.f32 %v1371, 1.442695
    %v1483 = vpow.pop %v1482
    %v1484 = vmul.f32 %v1372, 1.442695
    %v1485 = vpow.pop %v1484
    %v1486 = vmul.f32 %v1373, 1.442695
    %v1487 = vpow.pop %v1486
    %v1488 = vmul.f32 %v1374, 1.442695
    %v1489 = vpow.pop %v1488
    %v1490 = vmul.f32 %v1375, 1.442695
    %v1491 = vpow.pop %v1490
    %v1492 = vmul.f32 %v1376, 1.442695
    %v1493 = vpow.pop %v1492
    %v1494 = vmul.f32 %v1377, 1.442695
    %v1495 = vpow.pop %v1494
    %v1496 = vmul.f32 %v1378, 1.442695
    %v1497 = vpow.pop %v1496
    %v1498 = vmul.f32 %v1379, 1.442695
    %v1499 = vpow.pop %v1498
    %v1500 = vmul.f32 %v1380, 1.442695
    %v1501 = vpow.pop %v1500
    %v1502 = vmul.f32 %v1381, 1.442695
    %v1503 = vpow.pop %v1502
    %v1504 = vmul.f32 %v1382, 1.442695
    %v1505 = vpow.pop %v1504
    %v1506 = vmul.f32 %v1383, 1.442695
    %v1507 = vpow.pop %v1506
    %v1508 = vmul.f32 %v1384, 1.442695
    %v1509 = vpow.pop %v1508
    %v1510 = vmul.f32 %v1385, 1.442695
    %v1511 = vpow.pop %v1510
    %v1512 = vmul.f32 %v1386, 1.442695
    %v1513 = vpow.pop %v1512
    %v1514 = vmul.f32 %v1387, 1.442695
    %v1515 = vpow.pop %v1514
    %v1516 = vsel %vm1131, %v1389, 0.0
    %1517 = vadd.xlane.f32.xlu0 %v1516
    %v1518 = vpop.xlane.xlu0 %1517
    %v1519 = vsel %vm1131, %v1391, 0.0
    %1520 = vadd.xlane.f32.xlu0 %v1519
    %v1521 = vpop.xlane.xlu0 %1520
    %v1522 = vsel %vm1131, %v1393, 0.0
    %1523 = vadd.xlane.f32.xlu0 %v1522
    %v1524 = vpop.xlane.xlu0 %1523
    %v1525 = vsel %vm1131, %v1395, 0.0
    %1526 = vadd.xlane.f32.xlu0 %v1525
    %v1527 = vpop.xlane.xlu0 %1526
    %v1528 = vsel %vm1131, %v1397, 0.0
    %1529 = vadd.xlane.f32.xlu0 %v1528
    %v1530 = vpop.xlane.xlu0 %1529
    %v1531 = vsel %vm1131, %v1399, 0.0
    %1532 = vadd.xlane.f32.xlu0 %v1531
    %v1533 = vpop.xlane.xlu0 %1532
    %v1534 = vsel %vm1131, %v1401, 0.0
    %1535 = vadd.xlane.f32.xlu0 %v1534
    %v1536 = vpop.xlane.xlu0 %1535
    %v1537 = vsel %vm1131, %v1403, 0.0
    %1538 = vadd.xlane.f32.xlu0 %v1537
    %v1539 = vpop.xlane.xlu0 %1538
    %v1540 = vsel %vm1131, %v1405, 0.0
    %1541 = vadd.xlane.f32.xlu0 %v1540
    %v1542 = vpop.xlane.xlu0 %1541
    %v1543 = vsel %vm1131, %v1407, 0.0
    %1544 = vadd.xlane.f32.xlu0 %v1543
    %v1545 = vpop.xlane.xlu0 %1544
    %v1546 = vsel %vm1131, %v1409, 0.0
    %1547 = vadd.xlane.f32.xlu0 %v1546
    %v1548 = vpop.xlane.xlu0 %1547
    %v1549 = vsel %vm1131, %v1411, 0.0
    %1550 = vadd.xlane.f32.xlu0 %v1549
    %v1551 = vpop.xlane.xlu0 %1550
    %v1552 = vsel %vm1131, %v1413, 0.0
    %1553 = vadd.xlane.f32.xlu0 %v1552
    %v1554 = vpop.xlane.xlu0 %1553
    %v1555 = vsel %vm1131, %v1415, 0.0
    %1556 = vadd.xlane.f32.xlu0 %v1555
    %v1557 = vpop.xlane.xlu0 %1556
    %v1558 = vsel %vm1131, %v1417, 0.0
    %1559 = vadd.xlane.f32.xlu0 %v1558
    %v1560 = vpop.xlane.xlu0 %1559
    %v1561 = vsel %vm1131, %v1419, 0.0
    %1562 = vadd.xlane.f32.xlu0 %v1561
    %v1563 = vpop.xlane.xlu0 %1562
    %v1564 = vsel %vm1131, %v1421, 0.0
    %1565 = vadd.xlane.f32.xlu0 %v1564
    %v1566 = vpop.xlane.xlu0 %1565
    %v1567 = vsel %vm1131, %v1423, 0.0
    %1568 = vadd.xlane.f32.xlu0 %v1567
    %v1569 = vpop.xlane.xlu0 %1568
    %v1570 = vsel %vm1131, %v1425, 0.0
    %1571 = vadd.xlane.f32.xlu0 %v1570
    %v1572 = vpop.xlane.xlu0 %1571
    %v1573 = vsel %vm1131, %v1427, 0.0
    %1574 = vadd.xlane.f32.xlu0 %v1573
    %v1575 = vpop.xlane.xlu0 %1574
    %v1576 = vsel %vm1131, %v1429, 0.0
    %1577 = vadd.xlane.f32.xlu0 %v1576
    %v1578 = vpop.xlane.xlu0 %1577
    %v1579 = vsel %vm1131, %v1431, 0.0
    %1580 = vadd.xlane.f32.xlu0 %v1579
    %v1581 = vpop.xlane.xlu0 %1580
    %v1582 = vsel %vm1131, %v1433, 0.0
    %1583 = vadd.xlane.f32.xlu0 %v1582
    %v1584 = vpop.xlane.xlu0 %1583
    %v1585 = vsel %vm1131, %v1435, 0.0
    %1586 = vadd.xlane.f32.xlu0 %v1585
    %v1587 = vpop.xlane.xlu0 %1586
    %v1588 = vsel %vm1131, %v1437, 0.0
    %1589 = vadd.xlane.f32.xlu0 %v1588
    %v1590 = vpop.xlane.xlu0 %1589
    %v1591 = vsel %vm1131, %v1439, 0.0
    %1592 = vadd.xlane.f32.xlu0 %v1591
    %v1593 = vpop.xlane.xlu0 %1592
    %v1594 = vsel %vm1131, %v1441, 0.0
    %1595 = vadd.xlane.f32.xlu0 %v1594
    %v1596 = vpop.xlane.xlu0 %1595
    %v1597 = vsel %vm1131, %v1443, 0.0
    %1598 = vadd.xlane.f32.xlu0 %v1597
    %v1599 = vpop.xlane.xlu0 %1598
    %v1600 = vsel %vm1131, %v1445, 0.0
    %1601 = vadd.xlane.f32.xlu0 %v1600
    %v1602 = vpop.xlane.xlu0 %1601
    %v1603 = vsel %vm1131, %v1447, 0.0
    %1604 = vadd.xlane.f32.xlu0 %v1603
    %v1605 = vpop.xlane.xlu0 %1604
    %v1606 = vsel %vm1131, %v1449, 0.0
    %1607 = vadd.xlane.f32.xlu0 %v1606
    %v1608 = vpop.xlane.xlu0 %1607
    %v1609 = vsel %vm1131, %v1451, 0.0
    %1610 = vadd.xlane.f32.xlu0 %v1609
    %v1611 = vpop.xlane.xlu0 %1610
    %v1612 = vsel %vm1131, %v1453, 0.0
    %1613 = vadd.xlane.f32.xlu0 %v1612
    %v1614 = vpop.xlane.xlu0 %1613
    %v1615 = vsel %vm1131, %v1455, 0.0
    %1616 = vadd.xlane.f32.xlu0 %v1615
    %v1617 = vpop.xlane.xlu0 %1616
    %v1618 = vsel %vm1131, %v1457, 0.0
    %1619 = vadd.xlane.f32.xlu0 %v1618
    %v1620 = vpop.xlane.xlu0 %1619
    %v1621 = vsel %vm1131, %v1459, 0.0
    %1622 = vadd.xlane.f32.xlu0 %v1621
    %v1623 = vpop.xlane.xlu0 %1622
    %v1624 = vsel %vm1131, %v1461, 0.0
    %1625 = vadd.xlane.f32.xlu0 %v1624
    %v1626 = vpop.xlane.xlu0 %1625
    %v1627 = vsel %vm1131, %v1463, 0.0
    %1628 = vadd.xlane.f32.xlu0 %v1627
    %v1629 = vpop.xlane.xlu0 %1628
    %v1630 = vsel %vm1131, %v1465, 0.0
    %1631 = vadd.xlane.f32.xlu0 %v1630
    %v1632 = vpop.xlane.xlu0 %1631
    %v1633 = vsel %vm1131, %v1467, 0.0
    %1634 = vadd.xlane.f32.xlu0 %v1633
    %v1635 = vpop.xlane.xlu0 %1634
    %v1636 = vsel %vm1131, %v1469, 0.0
    %1637 = vadd.xlane.f32.xlu0 %v1636
    %v1638 = vpop.xlane.xlu0 %1637
    %v1639 = vsel %vm1131, %v1471, 0.0
    %1640 = vadd.xlane.f32.xlu0 %v1639
    %v1641 = vpop.xlane.xlu0 %1640
    %v1642 = vsel %vm1131, %v1473, 0.0
    %1643 = vadd.xlane.f32.xlu0 %v1642
    %v1644 = vpop.xlane.xlu0 %1643
    %v1645 = vsel %vm1131, %v1475, 0.0
    %1646 = vadd.xlane.f32.xlu0 %v1645
    %v1647 = vpop.xlane.xlu0 %1646
    %v1648 = vsel %vm1131, %v1477, 0.0
    %1649 = vadd.xlane.f32.xlu0 %v1648
    %v1650 = vpop.xlane.xlu0 %1649
    %v1651 = vsel %vm1131, %v1479, 0.0
    %1652 = vadd.xlane.f32.xlu0 %v1651
    %v1653 = vpop.xlane.xlu0 %1652
    %v1654 = vsel %vm1131, %v1481, 0.0
    %1655 = vadd.xlane.f32.xlu0 %v1654
    %v1656 = vpop.xlane.xlu0 %1655
    %v1657 = vsel %vm1131, %v1483, 0.0
    %1658 = vadd.xlane.f32.xlu0 %v1657
    %v1659 = vpop.xlane.xlu0 %1658
    %v1660 = vsel %vm1131, %v1485, 0.0
    %1661 = vadd.xlane.f32.xlu0 %v1660
    %v1662 = vpop.xlane.xlu0 %1661
    %v1663 = vsel %vm1131, %v1487, 0.0
    %1664 = vadd.xlane.f32.xlu0 %v1663
    %v1665 = vpop.xlane.xlu0 %1664
    %v1666 = vsel %vm1131, %v1489, 0.0
    %1667 = vadd.xlane.f32.xlu0 %v1666
    %v1668 = vpop.xlane.xlu0 %1667
    %v1669 = vsel %vm1131, %v1491, 0.0
    %1670 = vadd.xlane.f32.xlu0 %v1669
    %v1671 = vpop.xlane.xlu0 %1670
    %v1672 = vsel %vm1131, %v1493, 0.0
    %1673 = vadd.xlane.f32.xlu0 %v1672
    %v1674 = vpop.xlane.xlu0 %1673
    %v1675 = vsel %vm1131, %v1495, 0.0
    %1676 = vadd.xlane.f32.xlu0 %v1675
    %v1677 = vpop.xlane.xlu0 %1676
    %v1678 = vsel %vm1131, %v1497, 0.0
    %1679 = vadd.xlane.f32.xlu0 %v1678
    %v1680 = vpop.xlane.xlu0 %1679
    %v1681 = vsel %vm1131, %v1499, 0.0
    %1682 = vadd.xlane.f32.xlu0 %v1681
    %v1683 = vpop.xlane.xlu0 %1682
    %v1684 = vsel %vm1131, %v1501, 0.0
    %1685 = vadd.xlane.f32.xlu0 %v1684
    %v1686 = vpop.xlane.xlu0 %1685
    %v1687 = vsel %vm1131, %v1503, 0.0
    %1688 = vadd.xlane.f32.xlu0 %v1687
    %v1689 = vpop.xlane.xlu0 %1688
    %v1690 = vsel %vm1131, %v1505, 0.0
    %1691 = vadd.xlane.f32.xlu0 %v1690
    %v1692 = vpop.xlane.xlu0 %1691
    %v1693 = vsel %vm1131, %v1507, 0.0
    %1694 = vadd.xlane.f32.xlu0 %v1693
    %v1695 = vpop.xlane.xlu0 %1694
    %v1696 = vsel %vm1131, %v1509, 0.0
    %1697 = vadd.xlane.f32.xlu0 %v1696
    %v1698 = vpop.xlane.xlu0 %1697
    %v1699 = vsel %vm1131, %v1511, 0.0
    %1700 = vadd.xlane.f32.xlu0 %v1699
    %v1701 = vpop.xlane.xlu0 %1700
    %v1702 = vsel %vm1131, %v1513, 0.0
    %1703 = vadd.xlane.f32.xlu0 %v1702
    %v1704 = vpop.xlane.xlu0 %1703
    %v1705 = vsel %vm1131, %v1515, 0.0
    %1706 = vadd.xlane.f32.xlu0 %v1705
    %v1707 = vpop.xlane.xlu0 %1706
    %v1708 = vrcp.pop %v1518
    %v1709 = vrcp.pop %v1521
    %v1710 = vrcp.pop %v1524
    %v1711 = vrcp.pop %v1527
    %v1712 = vrcp.pop %v1530
    %v1713 = vrcp.pop %v1533
    %v1714 = vrcp.pop %v1536
    %v1715 = vrcp.pop %v1539
    %v1716 = vrcp.pop %v1542
    %v1717 = vrcp.pop %v1545
    %v1718 = vrcp.pop %v1548
    %v1719 = vrcp.pop %v1551
    %v1720 = vrcp.pop %v1554
    %v1721 = vrcp.pop %v1557
    %v1722 = vrcp.pop %v1560
    %v1723 = vrcp.pop %v1563
    %v1724 = vrcp.pop %v1566
    %v1725 = vrcp.pop %v1569
    %v1726 = vrcp.pop %v1572
    %v1727 = vrcp.pop %v1575
    %v1728 = vrcp.pop %v1578
    %v1729 = vrcp.pop %v1581
    %v1730 = vrcp.pop %v1584
    %v1731 = vrcp.pop %v1587
    %v1732 = vrcp.pop %v1590
    %v1733 = vrcp.pop %v1593
    %v1734 = vrcp.pop %v1596
    %v1735 = vrcp.pop %v1599
    %v1736 = vrcp.pop %v1602
    %v1737 = vrcp.pop %v1605
    %v1738 = vrcp.pop %v1608
    %v1739 = vrcp.pop %v1611
    %v1740 = vrcp.pop %v1614
    %v1741 = vrcp.pop %v1617
    %v1742 = vrcp.pop %v1620
    %v1743 = vrcp.pop %v1623
    %v1744 = vrcp.pop %v1626
    %v1745 = vrcp.pop %v1629
    %v1746 = vrcp.pop %v1632
    %v1747 = vrcp.pop %v1635
    %v1748 = vrcp.pop %v1638
    %v1749 = vrcp.pop %v1641
    %v1750 = vrcp.pop %v1644
    %v1751 = vrcp.pop %v1647
    %v1752 = vrcp.pop %v1650
    %v1753 = vrcp.pop %v1653
    %v1754 = vrcp.pop %v1656
    %v1755 = vrcp.pop %v1659
    %v1756 = vrcp.pop %v1662
    %v1757 = vrcp.pop %v1665
    %v1758 = vrcp.pop %v1668
    %v1759 = vrcp.pop %v1671
    %v1760 = vrcp.pop %v1674
    %v1761 = vrcp.pop %v1677
    %v1762 = vrcp.pop %v1680
    %v1763 = vrcp.pop %v1683
    %v1764 = vrcp.pop %v1686
    %v1765 = vrcp.pop %v1689
    %v1766 = vrcp.pop %v1692
    %v1767 = vrcp.pop %v1695
    %v1768 = vrcp.pop %v1698
    %v1769 = vrcp.pop %v1701
    %v1770 = vrcp.pop %v1704
    %v1771 = vrcp.pop %v1707
    %v1772 = vmul.f32 %v1389, %v1708
    %v1773 = vmul.f32 %v1391, %v1709
    %v1774 = vmul.f32 %v1393, %v1710
    %v1775 = vmul.f32 %v1395, %v1711
    %v1776 = vmul.f32 %v1397, %v1712
    %v1777 = vmul.f32 %v1399, %v1713
    %v1778 = vmul.f32 %v1401, %v1714
    %v1779 = vmul.f32 %v1403, %v1715
    %v1780 = vmul.f32 %v1405, %v1716
    %v1781 = vmul.f32 %v1407, %v1717
    %v1782 = vmul.f32 %v1409, %v1718
    %v1783 = vmul.f32 %v1411, %v1719
    %v1784 = vmul.f32 %v1413, %v1720
    %v1785 = vmul.f32 %v1415, %v1721
    %v1786 = vmul.f32 %v1417, %v1722
    %v1787 = vmul.f32 %v1419, %v1723
    %v1788 = vmul.f32 %v1421, %v1724
    %v1789 = vmul.f32 %v1423, %v1725
    %v1790 = vmul.f32 %v1425, %v1726
    %v1791 = vmul.f32 %v1427, %v1727
    %v1792 = vmul.f32 %v1429, %v1728
    %v1793 = vmul.f32 %v1431, %v1729
    %v1794 = vmul.f32 %v1433, %v1730
    %v1795 = vmul.f32 %v1435, %v1731
    %v1796 = vmul.f32 %v1437, %v1732
    %v1797 = vmul.f32 %v1439, %v1733
    %v1798 = vmul.f32 %v1441, %v1734
    %v1799 = vmul.f32 %v1443, %v1735
    %v1800 = vmul.f32 %v1445, %v1736
    %v1801 = vmul.f32 %v1447, %v1737
    %v1802 = vmul.f32 %v1449, %v1738
    %v1803 = vmul.f32 %v1451, %v1739
    %v1804 = vmul.f32 %v1453, %v1740
    %v1805 = vmul.f32 %v1455, %v1741
    %v1806 = vmul.f32 %v1457, %v1742
    %v1807 = vmul.f32 %v1459, %v1743
    %v1808 = vmul.f32 %v1461, %v1744
    %v1809 = vmul.f32 %v1463, %v1745
    %v1810 = vmul.f32 %v1465, %v1746
    %v1811 = vmul.f32 %v1467, %v1747
    %v1812 = vmul.f32 %v1469, %v1748
    %v1813 = vmul.f32 %v1471, %v1749
    %v1814 = vmul.f32 %v1473, %v1750
    %v1815 = vmul.f32 %v1475, %v1751
    %v1816 = vmul.f32 %v1477, %v1752
    %v1817 = vmul.f32 %v1479, %v1753
    %v1818 = vmul.f32 %v1481, %v1754
    %v1819 = vmul.f32 %v1483, %v1755
    %v1820 = vmul.f32 %v1485, %v1756
    %v1821 = vmul.f32 %v1487, %v1757
    %v1822 = vmul.f32 %v1489, %v1758
    %v1823 = vmul.f32 %v1491, %v1759
    %v1824 = vmul.f32 %v1493, %v1760
    %v1825 = vmul.f32 %v1495, %v1761
    %v1826 = vmul.f32 %v1497, %v1762
    %v1827 = vmul.f32 %v1499, %v1763
    %v1828 = vmul.f32 %v1501, %v1764
    %v1829 = vmul.f32 %v1503, %v1765
    %v1830 = vmul.f32 %v1505, %v1766
    %v1831 = vmul.f32 %v1507, %v1767
    %v1832 = vmul.f32 %v1509, %v1768
    %v1833 = vmul.f32 %v1511, %v1769
    %v1834 = vmul.f32 %v1513, %v1770
    %v1835 = vmul.f32 %v1515, %v1771
    %v1836 = vpack.c.bf16 %v1773, %v1772
    %v1837 = vpack.c.bf16 %v1775, %v1774
    %v1838 = vpack.c.bf16 %v1777, %v1776
    %v1839 = vpack.c.bf16 %v1779, %v1778
    %v1840 = vpack.c.bf16 %v1781, %v1780
    %v1841 = vpack.c.bf16 %v1783, %v1782
    %v1842 = vpack.c.bf16 %v1785, %v1784
    %v1843 = vpack.c.bf16 %v1787, %v1786
    %v1844 = vpack.c.bf16 %v1789, %v1788
    %v1845 = vpack.c.bf16 %v1791, %v1790
    %v1846 = vpack.c.bf16 %v1793, %v1792
    %v1847 = vpack.c.bf16 %v1795, %v1794
    %v1848 = vpack.c.bf16 %v1797, %v1796
    %v1849 = vpack.c.bf16 %v1799, %v1798
    %v1850 = vpack.c.bf16 %v1801, %v1800
    %v1851 = vpack.c.bf16 %v1803, %v1802
    %v1852 = vpack.c.bf16 %v1805, %v1804
    %v1853 = vpack.c.bf16 %v1807, %v1806
    %v1854 = vpack.c.bf16 %v1809, %v1808
    %v1855 = vpack.c.bf16 %v1811, %v1810
    %v1856 = vpack.c.bf16 %v1813, %v1812
    %v1857 = vpack.c.bf16 %v1815, %v1814
    %v1858 = vpack.c.bf16 %v1817, %v1816
    %v1859 = vpack.c.bf16 %v1819, %v1818
    %v1860 = vpack.c.bf16 %v1821, %v1820
    %v1861 = vpack.c.bf16 %v1823, %v1822
    %v1862 = vpack.c.bf16 %v1825, %v1824
    %v1863 = vpack.c.bf16 %v1827, %v1826
    %v1864 = vpack.c.bf16 %v1829, %v1828
    %v1865 = vpack.c.bf16 %v1831, %v1830
    %v1866 = vpack.c.bf16 %v1833, %v1832
    %v1867 = vpack.c.bf16 %v1835, %v1834
    %v1868 = vld [vmem:[%s5] sm:$0xff]
    %1869 = vxpose.xlu0.c.b16.start [1/8] %v1836, 128
    %1870 = vxpose.xlu0.c.b16.cont [2/8] %v1837, 128
    %1871 = vxpose.xlu0.c.b16.cont [3/8] %v1838, 128
    %1872 = vxpose.xlu0.c.b16.cont [4/8] %v1839, 128
    %1873 = vxpose.xlu0.c.b16.cont [5/8] %v1840, 128
    %1874 = vxpose.xlu0.c.b16.cont [6/8] %v1841, 128
    %1875 = vxpose.xlu0.c.b16.cont [7/8] %v1842, 128
    %1876 = vxpose.xlu0.c.b16.end [8/8] %v1843, 128
    %v1877 = vpop.trf.xlu0
    %v1878 = vpop.trf.xlu0
    %v1879 = vpop.trf.xlu0
    %v1880 = vpop.trf.xlu0
    %v1881 = vpop.trf.xlu0
    %v1882 = vpop.trf.xlu0
    %v1883 = vpop.trf.xlu0
    %v1884 = vpop.trf.xlu0
    %1885 = vxpose.xlu0.c.b16.start [1/8] %v1844, 128
    %1886 = vxpose.xlu0.c.b16.cont [2/8] %v1845, 128
    %1887 = vxpose.xlu0.c.b16.cont [3/8] %v1846, 128
    %1888 = vxpose.xlu0.c.b16.cont [4/8] %v1847, 128
    %1889 = vxpose.xlu0.c.b16.cont [5/8] %v1848, 128
    %1890 = vxpose.xlu0.c.b16.cont [6/8] %v1849, 128
    %1891 = vxpose.xlu0.c.b16.cont [7/8] %v1850, 128
    %1892 = vxpose.xlu0.c.b16.end [8/8] %v1851, 128
    %v1893 = vpop.trf.xlu0
    %v1894 = vpop.trf.xlu0
    %v1895 = vpop.trf.xlu0
    %v1896 = vpop.trf.xlu0
    %v1897 = vpop.trf.xlu0
    %v1898 = vpop.trf.xlu0
    %v1899 = vpop.trf.xlu0
    %v1900 = vpop.trf.xlu0
    %1901 = vmatprep.subr.bf16.mxu0 1065369472
    %1902 = vmatpush1.bf16.msra.mxu0 %v739
    %1903 = vmatprep.subr.bf16.mxu0 1065369472
    %1904 = vmatpush1.bf16.msra.mxu0 %v740
    %1905 = vmatprep.subr.bf16.mxu0 1065369472
    %1906 = vmatpush1.bf16.msra.mxu0 %v741
    %1907 = vmatprep.subr.bf16.mxu0 1065369472
    %1908 = vmatpush1.bf16.msra.mxu0 %v742
    %1909 = vmatprep.subr.bf16.mxu0 1065369472
    %1910 = vmatpush1.bf16.msra.mxu0 %v743
    %1911 = vmatprep.subr.bf16.mxu0 1065369472
    %1912 = vmatpush1.bf16.msra.mxu0 %v744
    %1913 = vmatprep.subr.bf16.mxu0 1065369472
    %1914 = vmatpush1.bf16.msra.mxu0 %v745
    %1915 = vmatprep.subr.bf16.mxu0 1065369472
    %1916 = vmatpush1.bf16.msra.mxu0 %v746
    %1917 = vmatprep.subr.bf16.mxu0 1065369472
    %1918 = vmatpush1.bf16.msra.mxu0 %v747
    %1919 = vmatprep.subr.bf16.mxu0 1065369472
    %1920 = vmatpush1.bf16.msra.mxu0 %v748
    %1921 = vmatprep.subr.bf16.mxu0 1065369472
    %1922 = vmatpush1.bf16.msra.mxu0 %v749
    %1923 = vmatprep.subr.bf16.mxu0 1065369472
    %1924 = vmatpush1.bf16.msra.mxu0 %v750
    %1925 = vmatprep.subr.bf16.mxu0 1065369472
    %1926 = vmatpush1.bf16.msra.mxu0 %v751
    %1927 = vmatprep.subr.bf16.mxu0 1065369472
    %1928 = vmatpush1.bf16.msra.mxu0 %v752
    %1929 = vmatprep.subr.bf16.mxu0 1065369472
    %1930 = vmatpush1.bf16.msra.mxu0 %v753
    %1931 = vmatprep.subr.bf16.mxu0 1065369472
    %1932 = vmatpush1.bf16.msra.mxu0 %v754
    %1933 = vmatprep.mubr.bf16.mxu0 %v1893
    %1934 = vmatmul.mubr.bf16.gmra.mrb[0].mxu0 %v1877
    %v1935 = vpop.f32.mrb[0].mxu0
    %v1936 = vadd.f32 0.0, %v1935
    %v1937 = vpop.f32.mrb[0].mxu0
    %v1938 = vadd.f32 0.0, %v1937
    %v1939 = vpop.f32.mrb[0].mxu0
    %v1940 = vpop.f32.mrb[0].mxu0
    %1941 = vdwg.mxu0
    %1943 = vset.pattern.permute.xlu0 0
    %1944 = vperm.xlu0 %1943, %v1938
    %v1945 = vpop.permute.xlu0 %1944
    %v1947 = vmul.f32 %v1945, %v1868
    %v1948 = vsub.f32 %v1936, %v1947
    %v1949 = vmul.f32 %v1948, %v1948
    %1950 = vadd.xlane.f32.xlu0 %v1949
    %v1951 = vpop.xlane.xlu0 %1950
    %v1952 = vadd.f32 %v1951, 1e-12
    %v1953 = vrsqrt.pop %v1952
    %v1954 = vmul.f32 %v1948, %v1953
    %v1955 = vmul.f32 %v1954, %v1954
    %1956 = vadd.xlane.f32.xlu0 %v1955
    %v1957 = vpop.xlane.xlu0 %1956
    %v1958 = vrot.slane %v1957, 4
    %v1959 = vadd.f32 %v1957, %v1958
    %v1960 = vrot.slane %v1959, 2
    %v1961 = vadd.f32 %v1959, %v1960
    %v1962 = vrot.slane %v1961, 1
    %v1963 = vadd.f32 %v1961, %v1962
    %s1964 = vtos %v1963
    %s1965 = sadd.f32 %s1964, 1e-12
    %v1966 = vstv %s1965
    %v1967 = vrsqrt.pop %v1966
    %s1968 = vtos %v1967
    %v1969 = vstv %s1968
    %v1970 = vmul.f32 %v1954, %v1969
    %1971 = vst [vmem:[#allocation2] sm:$0xff] %v1970
    %1972 = vxpose.xlu0.c.b16.start [1/8] %v1852, 128
    %1973 = vxpose.xlu0.c.b16.cont [2/8] %v1853, 128
    %1974 = vxpose.xlu0.c.b16.cont [3/8] %v1854, 128
    %1975 = vxpose.xlu0.c.b16.cont [4/8] %v1855, 128
    %1976 = vxpose.xlu0.c.b16.cont [5/8] %v1856, 128
    %1977 = vxpose.xlu0.c.b16.cont [6/8] %v1857, 128
    %1978 = vxpose.xlu0.c.b16.cont [7/8] %v1858, 128
    %1979 = vxpose.xlu0.c.b16.end [8/8] %v1859, 128
    %v1980 = vpop.trf.xlu0
    %v1981 = vpop.trf.xlu0
    %v1982 = vpop.trf.xlu0
    %v1983 = vpop.trf.xlu0
    %v1984 = vpop.trf.xlu0
    %v1985 = vpop.trf.xlu0
    %v1986 = vpop.trf.xlu0
    %v1987 = vpop.trf.xlu0
    %1988 = vxpose.xlu0.c.b16.start [1/8] %v1860, 128
    %1989 = vxpose.xlu0.c.b16.cont [2/8] %v1861, 128
    %1990 = vxpose.xlu0.c.b16.cont [3/8] %v1862, 128
    %1991 = vxpose.xlu0.c.b16.cont [4/8] %v1863, 128
    %1992 = vxpose.xlu0.c.b16.cont [5/8] %v1864, 128
    %1993 = vxpose.xlu0.c.b16.cont [6/8] %v1865, 128
    %1994 = vxpose.xlu0.c.b16.cont [7/8] %v1866, 128
    %1995 = vxpose.xlu0.c.b16.end [8/8] %v1867, 128
    %v1996 = vpop.trf.xlu0
    %v1997 = vpop.trf.xlu0
    %v1998 = vpop.trf.xlu0
    %v1999 = vpop.trf.xlu0
    %v2000 = vpop.trf.xlu0
    %v2001 = vpop.trf.xlu0
    %v2002 = vpop.trf.xlu0
    %v2003 = vpop.trf.xlu0
    %2004 = vmatprep.subr.bf16.mxu0 1065369472
    %2005 = vmatpush1.bf16.msra.mxu0 %v755
    %2006 = vmatprep.subr.bf16.mxu0 1065369472
    %2007 = vmatpush1.bf16.msra.mxu0 %v756
    %2008 = vmatprep.subr.bf16.mxu0 1065369472
    %2009 = vmatpush1.bf16.msra.mxu0 %v757
    %2010 = vmatprep.subr.bf16.mxu0 1065369472
    %2011 = vmatpush1.bf16.msra.mxu0 %v758
    %2012 = vmatprep.subr.bf16.mxu0 1065369472
    %2013 = vmatpush1.bf16.msra.mxu0 %v759
    %2014 = vmatprep.subr.bf16.mxu0 1065369472
    %2015 = vmatpush1.bf16.msra.mxu0 %v760
    %2016 = vmatprep.subr.bf16.mxu0 1065369472
    %2017 = vmatpush1.bf16.msra.mxu0 %v761
    %2018 = vmatprep.subr.bf16.mxu0 1065369472
    %2019 = vmatpush1.bf16.msra.mxu0 %v762
    %2020 = vmatprep.subr.bf16.mxu0 1065369472
    %2021 = vmatpush1.bf16.msra.mxu0 %v763
    %2022 = vmatprep.subr.bf16.mxu0 1065369472
    %2023 = vmatpush1.bf16.msra.mxu0 %v764
    %2024 = vmatprep.subr.bf16.mxu0 1065369472
    %2025 = vmatpush1.bf16.msra.mxu0 %v765
    %2026 = vmatprep.subr.bf16.mxu0 1065369472
    %2027 = vmatpush1.bf16.msra.mxu0 %v766
    %2028 = vmatprep.subr.bf16.mxu0 1065369472
    %2029 = vmatpush1.bf16.msra.mxu0 %v767
    %2030 = vmatprep.subr.bf16.mxu0 1065369472
    %2031 = vmatpush1.bf16.msra.mxu0 %v768
    %2032 = vmatprep.subr.bf16.mxu0 1065369472
    %2033 = vmatpush1.bf16.msra.mxu0 %v769
    %2034 = vmatprep.subr.bf16.mxu0 1065369472
    %2035 = vmatpush1.bf16.msra.mxu0 %v770
    %2036 = vmatprep.mubr.bf16.mxu0 %v1996
    %2037 = vmatmul.mubr.bf16.gmra.mrb[0].mxu0 %v1980
    %v2038 = vpop.f32.mrb[0].mxu0
    %v2039 = vadd.f32 0.0, %v2038
    %v2040 = vpop.f32.mrb[0].mxu0
    %v2041 = vadd.f32 0.0, %v2040
    %v2042 = vpop.f32.mrb[0].mxu0
    %v2043 = vpop.f32.mrb[0].mxu0
    %2044 = vdwg.mxu0
    %2046 = vset.pattern.permute.xlu0 0
    %2047 = vperm.xlu0 %2046, %v2041
    %v2048 = vpop.permute.xlu0 %2047
    %v2050 = vmul.f32 %v2048, %v1868
    %v2051 = vsub.f32 %v2039, %v2050
    %v2052 = vmul.f32 %v2051, %v2051
    %2053 = vadd.xlane.f32.xlu0 %v2052
    %v2054 = vpop.xlane.xlu0 %2053
    %v2055 = vadd.f32 %v2054, 1e-12
    %v2056 = vrsqrt.pop %v2055
    %v2057 = vmul.f32 %v2051, %v2056
    %v2058 = vmul.f32 %v2057, %v2057
    %2059 = vadd.xlane.f32.xlu0 %v2058
    %v2060 = vpop.xlane.xlu0 %2059
    %v2061 = vrot.slane %v2060, 4
    %v2062 = vadd.f32 %v2060, %v2061
    %v2063 = vrot.slane %v2062, 2
    %v2064 = vadd.f32 %v2062, %v2063
    %v2065 = vrot.slane %v2064, 1
    %v2066 = vadd.f32 %v2064, %v2065
    %s2067 = vtos %v2066
    %s2068 = sadd.f32 %s2067, 1e-12
    %v2069 = vstv %s2068
    %v2070 = vrsqrt.pop %v2069
    %s2071 = vtos %v2070
    %v2072 = vstv %s2071
    %v2073 = vmul.f32 %v2057, %v2072
    %s2074 = scalar_lea.vmem [#allocation2], 8
    %2075 = vst [vmem:[%s2074] sm:$0xff] %v2073
    // Predicated region
    $region26: #{tpu_custom_call.1} parent=1 // pred_check
      _
    $region27: #{tpu_custom_call.1} parent=1 // pred_check_branch
      %2077 = sbr.rel (0) target = $region29
    $region28: #{tpu_custom_call.1} parent=1 // pred_region
      %s2079 = ssub.s32 256, 256
      %2080 = vsyncadd [#allocation3], %s2079
      %s2081 = sshll.u32 [#allocation2], 4
      %s2082 = int_to_ptr.vmem [resolvable:$true] %s2081
      %2087 = dma.vmem_to_hbm [thread:$0]  %s2082, 256, %s6, [#allocation3], 128, 128, 8
    $region29: #{tpu_custom_call.1} parent=1 // pred_fallthru
      _
    // Predicated region
    $region30: #{tpu_custom_call.1} parent=1 // pred_check
      _
    $region31: #{tpu_custom_call.1} parent=1 // pred_check_branch
      %2089 = sbr.rel (0) target = $region33
    $region32: #{tpu_custom_call.1} parent=1 // pred_region
      %2090 = dma.done [#allocation3], 256
    $region33: #{tpu_custom_call.1} parent=1 // pred_fallthru
      _
    %2091 = vsyncpa [#allocation3], 1

</llo_original>
